<compile_context>
chip_gen: v5e
topology: v5e:2x2
jax: 0.10.0
libtpu: 0.0.40
codegen_flags: <defaults>
</compile_context>

<pallas_src>
import functools

import jax
import jax.numpy as jnp
from jax import lax
from jax.experimental import pallas as pl
from jax.experimental.pallas import tpu as pltpu

SOS_TOKEN = 0
MAX_LENGTH = 8


def _decoder_kernel(w_ref, b_ref, h0_ref, out_ref, hout_ref, *, num_steps):
    B, H = h0_ref.shape
    V = w_ref.shape[0] - H

    # ---- Parameter loads / broadcasts, hoisted out of the decode loop ------
    w_cat = w_ref[:, 0:4 * H]                          # [V+H, 4H] fused gates
    wout = w_ref[V:V + H, 4 * H:4 * H + V]             # [H, V]  output proj
    b4 = jnp.broadcast_to(b_ref[:, 0:4 * H], (B, 4 * H))
    bout = jnp.broadcast_to(b_ref[:, 4 * H:4 * H + V], (B, V))
    iota_v = lax.broadcasted_iota(jnp.int32, (B, V), 1)  # hoisted (no CSE)

    # Initial state: hidden = encoder hidden, input token = SOS (constant).
    h = h0_ref[...]                                            # [B, H]
    onehot = (iota_v == SOS_TOKEN).astype(jnp.float32)         # [B, V]

    for t in range(num_steps):          # static unroll: T is tiny & fixed
        # One fused MXU contraction for all GRU gate pre-activations.
        # Columns: [ r | z | n_x | n_h ]; rows 0:V already contain
        # relu(emb) @ W_x so the one-hot acts as the embedding gather.
        xh = jnp.concatenate([onehot, h], axis=-1)             # [B, V+H]
        g = jnp.dot(xh, w_cat, preferred_element_type=jnp.float32) + b4

        rz = jax.nn.sigmoid(g[:, 0:2 * H])    # fused r/z sigmoid (one EUP op)
        r = rz[:, 0:H]
        z = rz[:, H:2 * H]
        n = jnp.tanh(g[:, 2 * H:3 * H] + r * g[:, 3 * H:4 * H])
        h = (1.0 - z) * n + z * h                              # [B, H]

        logits = jnp.dot(h, wout, preferred_element_type=jnp.float32) + bout

        # log_softmax; m shared with the greedy feedback below.
        m = jnp.max(logits, axis=-1, keepdims=True)
        lse = jnp.log(jnp.sum(jnp.exp(logits - m), axis=-1,
                              keepdims=True)) + m
        out_ref[:, t * V:(t + 1) * V] = logits - lse   # per-step offset store

        if t + 1 < num_steps:
            # First-index argmax (matches torch.topk / jnp.argmax ties):
            # smallest lane index whose logit equals the shared max.
            idx = jnp.min(jnp.where(logits == m, iota_v, V),
                          axis=-1, keepdims=True)              # [B, 1]
            onehot = (iota_v == idx).astype(jnp.float32)       # [B, V]

    hout_ref[...] = h


def decoder_rnn_forward(params, encoder_hidden, max_length=MAX_LENGTH):
    """encoder_hidden: [1, B, H] (PyTorch GRU hidden layout).
    Returns (log_probs [B, T, V], hidden [1, B, H], None)."""
    emb = params["embedding"].astype(jnp.float32)        # [V, H]
    V, H = emb.shape
    h0 = encoder_hidden[0].astype(jnp.float32)           # [B, H]
    B = h0.shape[0]

    w_ih = params["w_ih"].astype(jnp.float32)            # [3H, H]
    w_hh = params["w_hh"].astype(jnp.float32)            # [3H, H]
    b_ih = params["b_ih"].astype(jnp.float32)
    b_hh = params["b_hh"].astype(jnp.float32)
    w_out = params["w_out"].astype(jnp.float32)          # [V, H]
    b_out = params["b_out"].astype(jnp.float32)          # [V]

    # --- Fuse everything into one weight slab [V+H, 4H+V] -------------------
    # Column blocks 0:4H = [ r | z | n_x | n_h ] gate weights; zero blocks keep
    # the n gate's x-side / h-side separable (for r * (h@Whn + b_hn)).
    # Rows 0:V   = relu(emb) @ W_x  (embedding gather + ReLU folded in).
    # Rows V:V+H = hidden-side gate weights; columns 4H:4H+V of those rows
    #              hold the output projection W_out^T.
    zhh = jnp.zeros((H, H), jnp.float32)
    w_x4 = jnp.concatenate(
        [w_ih[0:H].T, w_ih[H:2 * H].T, w_ih[2 * H:].T, zhh], axis=1)  # [H,4H]
    w_h4 = jnp.concatenate(
        [w_hh[0:H].T, w_hh[H:2 * H].T, zhh, w_hh[2 * H:].T], axis=1)  # [H,4H]
    e4 = jnp.maximum(emb, 0.0) @ w_x4                                 # [V,4H]

    w_slab = jnp.concatenate([
        jnp.concatenate([e4, jnp.zeros((V, V), jnp.float32)], axis=1),
        jnp.concatenate([w_h4, w_out.T], axis=1),
    ], axis=0)                                          # [V+H, 4H+V]

    # Fused / pre-summed biases, same column order, plus output bias.
    b_slab = jnp.concatenate([
        b_ih[0:H] + b_hh[0:H],                          # r
        b_ih[H:2 * H] + b_hh[H:2 * H],                  # z
        b_ih[2 * H:],                                   # n_x (b_in)
        b_hh[2 * H:],                                   # n_h (b_hn)
        b_out,                                          # output bias
    ])[None, :]                                         # [1, 4H+V]

    vmem = pl.BlockSpec(memory_space=pltpu.MemorySpace.VMEM)
    kernel = functools.partial(_decoder_kernel, num_steps=max_length)

    out_flat, h_out = pl.pallas_call(
        kernel,
        out_shape=(jax.ShapeDtypeStruct((B, max_length * V), jnp.float32),
                   jax.ShapeDtypeStruct((B, H), jnp.float32)),
        in_specs=[vmem, vmem, vmem],
        out_specs=(vmem, vmem),
    )(w_slab, b_slab, h0)

    log_probs = out_flat.reshape(B, max_length, V)      # [B, T, V]
    return log_probs, h_out[None, :, :], None


def decoder_rnn_reference(params, encoder_hidden, max_length=MAX_LENGTH):
    """Pure-JAX reference (greedy decode, target_tensor=None)."""
    emb = params["embedding"]
    H = emb.shape[1]
    w_ih, w_hh = params["w_ih"], params["w_hh"]
    b_ih, b_hh = params["b_ih"], params["b_hh"]
    w_out, b_out = params["w_out"], params["b_out"]
    h = encoder_hidden[0]
    B = h.shape[0]
    tok = jnp.full((B,), SOS_TOKEN, dtype=jnp.int32)
    outs = []
    for _ in range(max_length):
        x = jax.nn.relu(emb[tok])                            # [B, H]
        gi = x @ w_ih.T + b_ih
        gh = h @ w_hh.T + b_hh
        r = jax.nn.sigmoid(gi[:, :H] + gh[:, :H])
        z = jax.nn.sigmoid(gi[:, H:2 * H] + gh[:, H:2 * H])
        n = jnp.tanh(gi[:, 2 * H:] + r * gh[:, 2 * H:])
        h = (1.0 - z) * n + z * h
        logits = h @ w_out.T + b_out
        outs.append(logits[:, None, :])
        tok = jnp.argmax(logits, axis=-1).astype(jnp.int32)
    outs = jnp.concatenate(outs, axis=1)
    return jax.nn.log_softmax(outs, axis=-1), h[None], None


def make_params(key, hidden_size, output_size):
    ks = jax.random.split(key, 7)
    bound = 1.0 / jnp.sqrt(hidden_size)
    u = lambda k, shape: jax.random.uniform(k, shape, jnp.float32, -bound, bound)
    return {
        "embedding": jax.random.normal(ks[0], (output_size, hidden_size),
                                       jnp.float32),
        "w_ih": u(ks[1], (3 * hidden_size, hidden_size)),
        "w_hh": u(ks[2], (3 * hidden_size, hidden_size)),
        "b_ih": u(ks[3], (3 * hidden_size,)),
        "b_hh": u(ks[4], (3 * hidden_size,)),
        "w_out": u(ks[5], (output_size, hidden_size)),
        "b_out": u(ks[6], (output_size,)),
    }


if __name__ == "__main__":
    B, H, V = 8, 32, 32   # batch, hidden_size, output_size (vocab)
    key = jax.random.PRNGKey(0)
    kp, kh, ke = jax.random.split(key, 3)

    params = make_params(kp, H, V)
    encoder_hidden = jax.random.normal(kh, (1, B, H), jnp.float32)
    encoder_outputs = jax.random.normal(ke, (B, MAX_LENGTH, H), jnp.float32)
    # encoder_outputs is unused by DecoderRNN.forward (no attention); kept for
    # signature fidelity.

    log_probs, hidden, _ = decoder_rnn_forward(params, encoder_hidden)
    jax.block_until_ready(log_probs)
    jax.block_until_ready(hidden)

    ref_lp, ref_h, _ = decoder_rnn_reference(params, encoder_hidden)
    assert log_probs.shape == (B, MAX_LENGTH, V)
    assert hidden.shape == (1, B, H)
    assert jnp.allclose(log_probs, ref_lp, atol=1e-3, rtol=1e-3)
    assert jnp.allclose(hidden, ref_h, atol=1e-3, rtol=1e-3)

    print("KERNEL_OK")
</pallas_src>

<mosaic_0001>
module attributes {stable_mosaic.version = 11 : i64} {
  func.func @_decoder_kernel(%arg0: memref<64x160xf32, #tpu.memory_space<vmem>>, %arg1: memref<1x160xf32, #tpu.memory_space<vmem>>, %arg2: memref<8x32xf32, #tpu.memory_space<vmem>>, %arg3: memref<8x256xf32, #tpu.memory_space<vmem>>, %arg4: memref<8x32xf32, #tpu.memory_space<vmem>>) attributes {dimension_semantics = [], scalar_prefetch = 0 : i64, scratch_operands = 0 : i64, tpu.core_type = #tpu.core_type<tc>} {
    %c0 = arith.constant 0 : index
    %c0_0 = arith.constant 0 : index
    %0 = vector.load %arg0[%c0, %c0_0] : memref<64x160xf32, #tpu.memory_space<vmem>>, vector<64x128xf32>
    %c32 = arith.constant 32 : index
    %c128 = arith.constant 128 : index
    %1 = vector.load %arg0[%c32, %c128] : memref<64x160xf32, #tpu.memory_space<vmem>>, vector<32x32xf32>
    %c0_1 = arith.constant 0 : index
    %c0_2 = arith.constant 0 : index
    %2 = vector.load %arg1[%c0_1, %c0_2] : memref<1x160xf32, #tpu.memory_space<vmem>>, vector<1x128xf32>
    %3 = vector.shape_cast %2 : vector<1x128xf32> to vector<1x128xf32>
    %4 = vector.broadcast %3 : vector<1x128xf32> to vector<8x128xf32>
    %c0_3 = arith.constant 0 : index
    %c128_4 = arith.constant 128 : index
    %5 = vector.load %arg1[%c0_3, %c128_4] : memref<1x160xf32, #tpu.memory_space<vmem>>, vector<1x32xf32>
    %6 = vector.shape_cast %5 : vector<1x32xf32> to vector<1x32xf32>
    %7 = vector.broadcast %6 : vector<1x32xf32> to vector<8x32xf32>
    %8 = tpu.iota {dimensions = array<i32: 1>} : vector<8x32xi32>
    %c0_5 = arith.constant 0 : index
    %c0_6 = arith.constant 0 : index
    %9 = vector.load %arg2[%c0_5, %c0_6] : memref<8x32xf32, #tpu.memory_space<vmem>>, vector<8x32xf32>
    %c0_i32 = arith.constant 0 : i32
    %10 = vector.broadcast %c0_i32 : i32 to vector<8x32xi32>
    %11 = arith.cmpi eq, %8, %10 : vector<8x32xi32>
    %12 = arith.extui %11 : vector<8x32xi1> to vector<8x32xi32>
    %13 = arith.sitofp %12 : vector<8x32xi32> to vector<8x32xf32>
    %14 = tpu.concatenate %13, %9 in 1 : vector<8x32xf32>, vector<8x32xf32> -> vector<8x64xf32>
    %cst = arith.constant dense<0.000000e+00> : vector<8x128xf32>
    %15 = tpu.matmul %14, %0, %cst {dimension_numbers = #tpu.dot_dimension_numbers<[1], [0], [0], [1], [0, 0, 1, 1], [], []>} : vector<8x64xf32>, vector<64x128xf32>, vector<8x128xf32> -> vector<8x128xf32>
    %16 = arith.addf %15, %4 : vector<8x128xf32>
    %17 = vector.extract_strided_slice %16 {offsets = [0, 0], sizes = [8, 64], strides = [1, 1]} : vector<8x128xf32> to vector<8x64xf32>
    %18 = arith.negf %17 : vector<8x64xf32>
    %19 = math.exp %18 : vector<8x64xf32>
    %cst_7 = arith.constant 1.000000e+00 : f32
    %20 = vector.broadcast %cst_7 : f32 to vector<8x64xf32>
    %21 = arith.addf %20, %19 : vector<8x64xf32>
    %22 = arith.divf %20, %21 : vector<8x64xf32>
    %23 = vector.extract_strided_slice %22 {offsets = [0, 0], sizes = [8, 32], strides = [1, 1]} : vector<8x64xf32> to vector<8x32xf32>
    %24 = vector.extract_strided_slice %22 {offsets = [0, 32], sizes = [8, 32], strides = [1, 1]} : vector<8x64xf32> to vector<8x32xf32>
    %25 = vector.extract_strided_slice %16 {offsets = [0, 64], sizes = [8, 32], strides = [1, 1]} : vector<8x128xf32> to vector<8x32xf32>
    %26 = vector.extract_strided_slice %16 {offsets = [0, 96], sizes = [8, 32], strides = [1, 1]} : vector<8x128xf32> to vector<8x32xf32>
    %27 = arith.mulf %23, %26 : vector<8x32xf32>
    %28 = arith.addf %25, %27 : vector<8x32xf32>
    %29 = math.tanh %28 : vector<8x32xf32>
    %cst_8 = arith.constant 1.000000e+00 : f32
    %30 = vector.broadcast %cst_8 : f32 to vector<8x32xf32>
    %31 = arith.subf %30, %24 : vector<8x32xf32>
    %32 = arith.mulf %31, %29 : vector<8x32xf32>
    %33 = arith.mulf %24, %9 : vector<8x32xf32>
    %34 = arith.addf %32, %33 : vector<8x32xf32>
    %cst_9 = arith.constant dense<0.000000e+00> : vector<8x32xf32>
    %35 = tpu.matmul %34, %1, %cst_9 {dimension_numbers = #tpu.dot_dimension_numbers<[1], [0], [0], [1], [0, 0, 1, 1], [], []>} : vector<8x32xf32>, vector<32x32xf32>, vector<8x32xf32> -> vector<8x32xf32>
    %36 = arith.addf %35, %7 : vector<8x32xf32>
    %cst_10 = arith.constant dense<0xFF800000> : vector<8xf32>
    %37 = vector.multi_reduction <maximumf>, %36, %cst_10 [1] : vector<8x32xf32> to vector<8xf32>
    %38 = vector.shape_cast %37 : vector<8xf32> to vector<8x1xf32>
    %39 = vector.broadcast %38 : vector<8x1xf32> to vector<8x32xf32>
    %40 = arith.subf %36, %39 : vector<8x32xf32>
    %41 = math.exp %40 : vector<8x32xf32>
    %cst_11 = arith.constant dense<0.000000e+00> : vector<8xf32>
    %42 = vector.multi_reduction <add>, %41, %cst_11 [1] : vector<8x32xf32> to vector<8xf32>
    %43 = vector.shape_cast %42 : vector<8xf32> to vector<8x1xf32>
    %44 = math.log %43 : vector<8x1xf32>
    %45 = arith.addf %44, %38 : vector<8x1xf32>
    %46 = vector.broadcast %45 : vector<8x1xf32> to vector<8x32xf32>
    %47 = arith.subf %36, %46 : vector<8x32xf32>
    %c0_12 = arith.constant 0 : index
    %c0_13 = arith.constant 0 : index
    %48 = vector.load %arg3[%c0_12, %c0_13] : memref<8x256xf32, #tpu.memory_space<vmem>>, vector<8x32xf32>
    tpu.vector_store %arg3[%c0_12, %c0_13], %47 {strides = array<i32>} : memref<8x256xf32, #tpu.memory_space<vmem>>, vector<8x32xf32>,
    %49 = vector.broadcast %38 : vector<8x1xf32> to vector<8x32xf32>
    %50 = arith.cmpf oeq, %36, %49 : vector<8x32xf32>
    %c32_i32 = arith.constant 32 : i32
    %51 = vector.broadcast %c32_i32 : i32 to vector<8x32xi32>
    %52 = arith.select %50, %8, %51 : vector<8x32xi1>, vector<8x32xi32>
    %cst_14 = arith.constant dense<2147483647> : vector<8xi32>
    %53 = vector.multi_reduction <minsi>, %52, %cst_14 [1] : vector<8x32xi32> to vector<8xi32>
    %54 = vector.shape_cast %53 : vector<8xi32> to vector<8x1xi32>
    %55 = vector.broadcast %54 : vector<8x1xi32> to vector<8x32xi32>
    %56 = arith.cmpi eq, %8, %55 : vector<8x32xi32>
    %57 = arith.extui %56 : vector<8x32xi1> to vector<8x32xi32>
    %58 = arith.sitofp %57 : vector<8x32xi32> to vector<8x32xf32>
    %59 = tpu.concatenate %58, %34 in 1 : vector<8x32xf32>, vector<8x32xf32> -> vector<8x64xf32>
    %cst_15 = arith.constant dense<0.000000e+00> : vector<8x128xf32>
    %60 = tpu.matmul %59, %0, %cst_15 {dimension_numbers = #tpu.dot_dimension_numbers<[1], [0], [0], [1], [0, 0, 1, 1], [], []>} : vector<8x64xf32>, vector<64x128xf32>, vector<8x128xf32> -> vector<8x128xf32>
    %61 = arith.addf %60, %4 : vector<8x128xf32>
    %62 = vector.extract_strided_slice %61 {offsets = [0, 0], sizes = [8, 64], strides = [1, 1]} : vector<8x128xf32> to vector<8x64xf32>
    %63 = arith.negf %62 : vector<8x64xf32>
    %64 = math.exp %63 : vector<8x64xf32>
    %cst_16 = arith.constant 1.000000e+00 : f32
    %65 = vector.broadcast %cst_16 : f32 to vector<8x64xf32>
    %66 = arith.addf %65, %64 : vector<8x64xf32>
    %67 = arith.divf %65, %66 : vector<8x64xf32>
    %68 = vector.extract_strided_slice %67 {offsets = [0, 0], sizes = [8, 32], strides = [1, 1]} : vector<8x64xf32> to vector<8x32xf32>
    %69 = vector.extract_strided_slice %67 {offsets = [0, 32], sizes = [8, 32], strides = [1, 1]} : vector<8x64xf32> to vector<8x32xf32>
    %70 = vector.extract_strided_slice %61 {offsets = [0, 64], sizes = [8, 32], strides = [1, 1]} : vector<8x128xf32> to vector<8x32xf32>
    %71 = vector.extract_strided_slice %61 {offsets = [0, 96], sizes = [8, 32], strides = [1, 1]} : vector<8x128xf32> to vector<8x32xf32>
    %72 = arith.mulf %68, %71 : vector<8x32xf32>
    %73 = arith.addf %70, %72 : vector<8x32xf32>
    %74 = math.tanh %73 : vector<8x32xf32>
    %cst_17 = arith.constant 1.000000e+00 : f32
    %75 = vector.broadcast %cst_17 : f32 to vector<8x32xf32>
    %76 = arith.subf %75, %69 : vector<8x32xf32>
    %77 = arith.mulf %76, %74 : vector<8x32xf32>
    %78 = arith.mulf %69, %34 : vector<8x32xf32>
    %79 = arith.addf %77, %78 : vector<8x32xf32>
    %cst_18 = arith.constant dense<0.000000e+00> : vector<8x32xf32>
    %80 = tpu.matmul %79, %1, %cst_18 {dimension_numbers = #tpu.dot_dimension_numbers<[1], [0], [0], [1], [0, 0, 1, 1], [], []>} : vector<8x32xf32>, vector<32x32xf32>, vector<8x32xf32> -> vector<8x32xf32>
    %81 = arith.addf %80, %7 : vector<8x32xf32>
    %cst_19 = arith.constant dense<0xFF800000> : vector<8xf32>
    %82 = vector.multi_reduction <maximumf>, %81, %cst_19 [1] : vector<8x32xf32> to vector<8xf32>
    %83 = vector.shape_cast %82 : vector<8xf32> to vector<8x1xf32>
    %84 = vector.broadcast %83 : vector<8x1xf32> to vector<8x32xf32>
    %85 = arith.subf %81, %84 : vector<8x32xf32>
    %86 = math.exp %85 : vector<8x32xf32>
    %cst_20 = arith.constant dense<0.000000e+00> : vector<8xf32>
    %87 = vector.multi_reduction <add>, %86, %cst_20 [1] : vector<8x32xf32> to vector<8xf32>
    %88 = vector.shape_cast %87 : vector<8xf32> to vector<8x1xf32>
    %89 = math.log %88 : vector<8x1xf32>
    %90 = arith.addf %89, %83 : vector<8x1xf32>
    %91 = vector.broadcast %90 : vector<8x1xf32> to vector<8x32xf32>
    %92 = arith.subf %81, %91 : vector<8x32xf32>
    %c0_21 = arith.constant 0 : index
    %c32_22 = arith.constant 32 : index
    %93 = vector.load %arg3[%c0_21, %c32_22] : memref<8x256xf32, #tpu.memory_space<vmem>>, vector<8x32xf32>
    tpu.vector_store %arg3[%c0_21, %c32_22], %92 {strides = array<i32>} : memref<8x256xf32, #tpu.memory_space<vmem>>, vector<8x32xf32>,
    %94 = vector.broadcast %83 : vector<8x1xf32> to vector<8x32xf32>
    %95 = arith.cmpf oeq, %81, %94 : vector<8x32xf32>
    %c32_i32_23 = arith.constant 32 : i32
    %96 = vector.broadcast %c32_i32_23 : i32 to vector<8x32xi32>
    %97 = arith.select %95, %8, %96 : vector<8x32xi1>, vector<8x32xi32>
    %cst_24 = arith.constant dense<2147483647> : vector<8xi32>
    %98 = vector.multi_reduction <minsi>, %97, %cst_24 [1] : vector<8x32xi32> to vector<8xi32>
    %99 = vector.shape_cast %98 : vector<8xi32> to vector<8x1xi32>
    %100 = vector.broadcast %99 : vector<8x1xi32> to vector<8x32xi32>
    %101 = arith.cmpi eq, %8, %100 : vector<8x32xi32>
    %102 = arith.extui %101 : vector<8x32xi1> to vector<8x32xi32>
    %103 = arith.sitofp %102 : vector<8x32xi32> to vector<8x32xf32>
    %104 = tpu.concatenate %103, %79 in 1 : vector<8x32xf32>, vector<8x32xf32> -> vector<8x64xf32>
    %cst_25 = arith.constant dense<0.000000e+00> : vector<8x128xf32>
    %105 = tpu.matmul %104, %0, %cst_25 {dimension_numbers = #tpu.dot_dimension_numbers<[1], [0], [0], [1], [0, 0, 1, 1], [], []>} : vector<8x64xf32>, vector<64x128xf32>, vector<8x128xf32> -> vector<8x128xf32>
    %106 = arith.addf %105, %4 : vector<8x128xf32>
    %107 = vector.extract_strided_slice %106 {offsets = [0, 0], sizes = [8, 64], strides = [1, 1]} : vector<8x128xf32> to vector<8x64xf32>
    %108 = arith.negf %107 : vector<8x64xf32>
    %109 = math.exp %108 : vector<8x64xf32>
    %cst_26 = arith.constant 1.000000e+00 : f32
    %110 = vector.broadcast %cst_26 : f32 to vector<8x64xf32>
    %111 = arith.addf %110, %109 : vector<8x64xf32>
    %112 = arith.divf %110, %111 : vector<8x64xf32>
    %113 = vector.extract_strided_slice %112 {offsets = [0, 0], sizes = [8, 32], strides = [1, 1]} : vector<8x64xf32> to vector<8x32xf32>
    %114 = vector.extract_strided_slice %112 {offsets = [0, 32], sizes = [8, 32], strides = [1, 1]} : vector<8x64xf32> to vector<8x32xf32>
    %115 = vector.extract_strided_slice %106 {offsets = [0, 64], sizes = [8, 32], strides = [1, 1]} : vector<8x128xf32> to vector<8x32xf32>
    %116 = vector.extract_strided_slice %106 {offsets = [0, 96], sizes = [8, 32], strides = [1, 1]} : vector<8x128xf32> to vector<8x32xf32>
    %117 = arith.mulf %113, %116 : vector<8x32xf32>
    %118 = arith.addf %115, %117 : vector<8x32xf32>
    %119 = math.tanh %118 : vector<8x32xf32>
    %cst_27 = arith.constant 1.000000e+00 : f32
    %120 = vector.broadcast %cst_27 : f32 to vector<8x32xf32>
    %121 = arith.subf %120, %114 : vector<8x32xf32>
    %122 = arith.mulf %121, %119 : vector<8x32xf32>
    %123 = arith.mulf %114, %79 : vector<8x32xf32>
    %124 = arith.addf %122, %123 : vector<8x32xf32>
    %cst_28 = arith.constant dense<0.000000e+00> : vector<8x32xf32>
    %125 = tpu.matmul %124, %1, %cst_28 {dimension_numbers = #tpu.dot_dimension_numbers<[1], [0], [0], [1], [0, 0, 1, 1], [], []>} : vector<8x32xf32>, vector<32x32xf32>, vector<8x32xf32> -> vector<8x32xf32>
    %126 = arith.addf %125, %7 : vector<8x32xf32>
    %cst_29 = arith.constant dense<0xFF800000> : vector<8xf32>
    %127 = vector.multi_reduction <maximumf>, %126, %cst_29 [1] : vector<8x32xf32> to vector<8xf32>
    %128 = vector.shape_cast %127 : vector<8xf32> to vector<8x1xf32>
    %129 = vector.broadcast %128 : vector<8x1xf32> to vector<8x32xf32>
    %130 = arith.subf %126, %129 : vector<8x32xf32>
    %131 = math.exp %130 : vector<8x32xf32>
    %cst_30 = arith.constant dense<0.000000e+00> : vector<8xf32>
    %132 = vector.multi_reduction <add>, %131, %cst_30 [1] : vector<8x32xf32> to vector<8xf32>
    %133 = vector.shape_cast %132 : vector<8xf32> to vector<8x1xf32>
    %134 = math.log %133 : vector<8x1xf32>
    %135 = arith.addf %134, %128 : vector<8x1xf32>
    %136 = vector.broadcast %135 : vector<8x1xf32> to vector<8x32xf32>
    %137 = arith.subf %126, %136 : vector<8x32xf32>
    %c0_31 = arith.constant 0 : index
    %c64 = arith.constant 64 : index
    %138 = vector.load %arg3[%c0_31, %c64] : memref<8x256xf32, #tpu.memory_space<vmem>>, vector<8x32xf32>
    tpu.vector_store %arg3[%c0_31, %c64], %137 {strides = array<i32>} : memref<8x256xf32, #tpu.memory_space<vmem>>, vector<8x32xf32>,
    %139 = vector.broadcast %128 : vector<8x1xf32> to vector<8x32xf32>
    %140 = arith.cmpf oeq, %126, %139 : vector<8x32xf32>
    %c32_i32_32 = arith.constant 32 : i32
    %141 = vector.broadcast %c32_i32_32 : i32 to vector<8x32xi32>
    %142 = arith.select %140, %8, %141 : vector<8x32xi1>, vector<8x32xi32>
    %cst_33 = arith.constant dense<2147483647> : vector<8xi32>
    %143 = vector.multi_reduction <minsi>, %142, %cst_33 [1] : vector<8x32xi32> to vector<8xi32>
    %144 = vector.shape_cast %143 : vector<8xi32> to vector<8x1xi32>
    %145 = vector.broadcast %144 : vector<8x1xi32> to vector<8x32xi32>
    %146 = arith.cmpi eq, %8, %145 : vector<8x32xi32>
    %147 = arith.extui %146 : vector<8x32xi1> to vector<8x32xi32>
    %148 = arith.sitofp %147 : vector<8x32xi32> to vector<8x32xf32>
    %149 = tpu.concatenate %148, %124 in 1 : vector<8x32xf32>, vector<8x32xf32> -> vector<8x64xf32>
    %cst_34 = arith.constant dense<0.000000e+00> : vector<8x128xf32>
    %150 = tpu.matmul %149, %0, %cst_34 {dimension_numbers = #tpu.dot_dimension_numbers<[1], [0], [0], [1], [0, 0, 1, 1], [], []>} : vector<8x64xf32>, vector<64x128xf32>, vector<8x128xf32> -> vector<8x128xf32>
    %151 = arith.addf %150, %4 : vector<8x128xf32>
    %152 = vector.extract_strided_slice %151 {offsets = [0, 0], sizes = [8, 64], strides = [1, 1]} : vector<8x128xf32> to vector<8x64xf32>
    %153 = arith.negf %152 : vector<8x64xf32>
    %154 = math.exp %153 : vector<8x64xf32>
    %cst_35 = arith.constant 1.000000e+00 : f32
    %155 = vector.broadcast %cst_35 : f32 to vector<8x64xf32>
    %156 = arith.addf %155, %154 : vector<8x64xf32>
    %157 = arith.divf %155, %156 : vector<8x64xf32>
    %158 = vector.extract_strided_slice %157 {offsets = [0, 0], sizes = [8, 32], strides = [1, 1]} : vector<8x64xf32> to vector<8x32xf32>
    %159 = vector.extract_strided_slice %157 {offsets = [0, 32], sizes = [8, 32], strides = [1, 1]} : vector<8x64xf32> to vector<8x32xf32>
    %160 = vector.extract_strided_slice %151 {offsets = [0, 64], sizes = [8, 32], strides = [1, 1]} : vector<8x128xf32> to vector<8x32xf32>
    %161 = vector.extract_strided_slice %151 {offsets = [0, 96], sizes = [8, 32], strides = [1, 1]} : vector<8x128xf32> to vector<8x32xf32>
    %162 = arith.mulf %158, %161 : vector<8x32xf32>
    %163 = arith.addf %160, %162 : vector<8x32xf32>
    %164 = math.tanh %163 : vector<8x32xf32>
    %cst_36 = arith.constant 1.000000e+00 : f32
    %165 = vector.broadcast %cst_36 : f32 to vector<8x32xf32>
    %166 = arith.subf %165, %159 : vector<8x32xf32>
    %167 = arith.mulf %166, %164 : vector<8x32xf32>
    %168 = arith.mulf %159, %124 : vector<8x32xf32>
    %169 = arith.addf %167, %168 : vector<8x32xf32>
    %cst_37 = arith.constant dense<0.000000e+00> : vector<8x32xf32>
    %170 = tpu.matmul %169, %1, %cst_37 {dimension_numbers = #tpu.dot_dimension_numbers<[1], [0], [0], [1], [0, 0, 1, 1], [], []>} : vector<8x32xf32>, vector<32x32xf32>, vector<8x32xf32> -> vector<8x32xf32>
    %171 = arith.addf %170, %7 : vector<8x32xf32>
    %cst_38 = arith.constant dense<0xFF800000> : vector<8xf32>
    %172 = vector.multi_reduction <maximumf>, %171, %cst_38 [1] : vector<8x32xf32> to vector<8xf32>
    %173 = vector.shape_cast %172 : vector<8xf32> to vector<8x1xf32>
    %174 = vector.broadcast %173 : vector<8x1xf32> to vector<8x32xf32>
    %175 = arith.subf %171, %174 : vector<8x32xf32>
    %176 = math.exp %175 : vector<8x32xf32>
    %cst_39 = arith.constant dense<0.000000e+00> : vector<8xf32>
    %177 = vector.multi_reduction <add>, %176, %cst_39 [1] : vector<8x32xf32> to vector<8xf32>
    %178 = vector.shape_cast %177 : vector<8xf32> to vector<8x1xf32>
    %179 = math.log %178 : vector<8x1xf32>
    %180 = arith.addf %179, %173 : vector<8x1xf32>
    %181 = vector.broadcast %180 : vector<8x1xf32> to vector<8x32xf32>
    %182 = arith.subf %171, %181 : vector<8x32xf32>
    %c0_40 = arith.constant 0 : index
    %c96 = arith.constant 96 : index
    %183 = vector.load %arg3[%c0_40, %c96] : memref<8x256xf32, #tpu.memory_space<vmem>>, vector<8x32xf32>
    tpu.vector_store %arg3[%c0_40, %c96], %182 {strides = array<i32>} : memref<8x256xf32, #tpu.memory_space<vmem>>, vector<8x32xf32>,
    %184 = vector.broadcast %173 : vector<8x1xf32> to vector<8x32xf32>
    %185 = arith.cmpf oeq, %171, %184 : vector<8x32xf32>
    %c32_i32_41 = arith.constant 32 : i32
    %186 = vector.broadcast %c32_i32_41 : i32 to vector<8x32xi32>
    %187 = arith.select %185, %8, %186 : vector<8x32xi1>, vector<8x32xi32>
    %cst_42 = arith.constant dense<2147483647> : vector<8xi32>
    %188 = vector.multi_reduction <minsi>, %187, %cst_42 [1] : vector<8x32xi32> to vector<8xi32>
    %189 = vector.shape_cast %188 : vector<8xi32> to vector<8x1xi32>
    %190 = vector.broadcast %189 : vector<8x1xi32> to vector<8x32xi32>
    %191 = arith.cmpi eq, %8, %190 : vector<8x32xi32>
    %192 = arith.extui %191 : vector<8x32xi1> to vector<8x32xi32>
    %193 = arith.sitofp %192 : vector<8x32xi32> to vector<8x32xf32>
    %194 = tpu.concatenate %193, %169 in 1 : vector<8x32xf32>, vector<8x32xf32> -> vector<8x64xf32>
    %cst_43 = arith.constant dense<0.000000e+00> : vector<8x128xf32>
    %195 = tpu.matmul %194, %0, %cst_43 {dimension_numbers = #tpu.dot_dimension_numbers<[1], [0], [0], [1], [0, 0, 1, 1], [], []>} : vector<8x64xf32>, vector<64x128xf32>, vector<8x128xf32> -> vector<8x128xf32>
    %196 = arith.addf %195, %4 : vector<8x128xf32>
    %197 = vector.extract_strided_slice %196 {offsets = [0, 0], sizes = [8, 64], strides = [1, 1]} : vector<8x128xf32> to vector<8x64xf32>
    %198 = arith.negf %197 : vector<8x64xf32>
    %199 = math.exp %198 : vector<8x64xf32>
    %cst_44 = arith.constant 1.000000e+00 : f32
    %200 = vector.broadcast %cst_44 : f32 to vector<8x64xf32>
    %201 = arith.addf %200, %199 : vector<8x64xf32>
    %202 = arith.divf %200, %201 : vector<8x64xf32>
    %203 = vector.extract_strided_slice %202 {offsets = [0, 0], sizes = [8, 32], strides = [1, 1]} : vector<8x64xf32> to vector<8x32xf32>
    %204 = vector.extract_strided_slice %202 {offsets = [0, 32], sizes = [8, 32], strides = [1, 1]} : vector<8x64xf32> to vector<8x32xf32>
    %205 = vector.extract_strided_slice %196 {offsets = [0, 64], sizes = [8, 32], strides = [1, 1]} : vector<8x128xf32> to vector<8x32xf32>
    %206 = vector.extract_strided_slice %196 {offsets = [0, 96], sizes = [8, 32], strides = [1, 1]} : vector<8x128xf32> to vector<8x32xf32>
    %207 = arith.mulf %203, %206 : vector<8x32xf32>
    %208 = arith.addf %205, %207 : vector<8x32xf32>
    %209 = math.tanh %208 : vector<8x32xf32>
    %cst_45 = arith.constant 1.000000e+00 : f32
    %210 = vector.broadcast %cst_45 : f32 to vector<8x32xf32>
    %211 = arith.subf %210, %204 : vector<8x32xf32>
    %212 = arith.mulf %211, %209 : vector<8x32xf32>
    %213 = arith.mulf %204, %169 : vector<8x32xf32>
    %214 = arith.addf %212, %213 : vector<8x32xf32>
    %cst_46 = arith.constant dense<0.000000e+00> : vector<8x32xf32>
    %215 = tpu.matmul %214, %1, %cst_46 {dimension_numbers = #tpu.dot_dimension_numbers<[1], [0], [0], [1], [0, 0, 1, 1], [], []>} : vector<8x32xf32>, vector<32x32xf32>, vector<8x32xf32> -> vector<8x32xf32>
    %216 = arith.addf %215, %7 : vector<8x32xf32>
    %cst_47 = arith.constant dense<0xFF800000> : vector<8xf32>
    %217 = vector.multi_reduction <maximumf>, %216, %cst_47 [1] : vector<8x32xf32> to vector<8xf32>
    %218 = vector.shape_cast %217 : vector<8xf32> to vector<8x1xf32>
    %219 = vector.broadcast %218 : vector<8x1xf32> to vector<8x32xf32>
    %220 = arith.subf %216, %219 : vector<8x32xf32>
    %221 = math.exp %220 : vector<8x32xf32>
    %cst_48 = arith.constant dense<0.000000e+00> : vector<8xf32>
    %222 = vector.multi_reduction <add>, %221, %cst_48 [1] : vector<8x32xf32> to vector<8xf32>
    %223 = vector.shape_cast %222 : vector<8xf32> to vector<8x1xf32>
    %224 = math.log %223 : vector<8x1xf32>
    %225 = arith.addf %224, %218 : vector<8x1xf32>
    %226 = vector.broadcast %225 : vector<8x1xf32> to vector<8x32xf32>
    %227 = arith.subf %216, %226 : vector<8x32xf32>
    %c0_49 = arith.constant 0 : index
    %c128_50 = arith.constant 128 : index
    %228 = vector.load %arg3[%c0_49, %c128_50] : memref<8x256xf32, #tpu.memory_space<vmem>>, vector<8x32xf32>
    tpu.vector_store %arg3[%c0_49, %c128_50], %227 {strides = array<i32>} : memref<8x256xf32, #tpu.memory_space<vmem>>, vector<8x32xf32>,
    %229 = vector.broadcast %218 : vector<8x1xf32> to vector<8x32xf32>
    %230 = arith.cmpf oeq, %216, %229 : vector<8x32xf32>
    %c32_i32_51 = arith.constant 32 : i32
    %231 = vector.broadcast %c32_i32_51 : i32 to vector<8x32xi32>
    %232 = arith.select %230, %8, %231 : vector<8x32xi1>, vector<8x32xi32>
    %cst_52 = arith.constant dense<2147483647> : vector<8xi32>
    %233 = vector.multi_reduction <minsi>, %232, %cst_52 [1] : vector<8x32xi32> to vector<8xi32>
    %234 = vector.shape_cast %233 : vector<8xi32> to vector<8x1xi32>
    %235 = vector.broadcast %234 : vector<8x1xi32> to vector<8x32xi32>
    %236 = arith.cmpi eq, %8, %235 : vector<8x32xi32>
    %237 = arith.extui %236 : vector<8x32xi1> to vector<8x32xi32>
    %238 = arith.sitofp %237 : vector<8x32xi32> to vector<8x32xf32>
    %239 = tpu.concatenate %238, %214 in 1 : vector<8x32xf32>, vector<8x32xf32> -> vector<8x64xf32>
    %cst_53 = arith.constant dense<0.000000e+00> : vector<8x128xf32>
    %240 = tpu.matmul %239, %0, %cst_53 {dimension_numbers = #tpu.dot_dimension_numbers<[1], [0], [0], [1], [0, 0, 1, 1], [], []>} : vector<8x64xf32>, vector<64x128xf32>, vector<8x128xf32> -> vector<8x128xf32>
    %241 = arith.addf %240, %4 : vector<8x128xf32>
    %242 = vector.extract_strided_slice %241 {offsets = [0, 0], sizes = [8, 64], strides = [1, 1]} : vector<8x128xf32> to vector<8x64xf32>
    %243 = arith.negf %242 : vector<8x64xf32>
    %244 = math.exp %243 : vector<8x64xf32>
    %cst_54 = arith.constant 1.000000e+00 : f32
    %245 = vector.broadcast %cst_54 : f32 to vector<8x64xf32>
    %246 = arith.addf %245, %244 : vector<8x64xf32>
    %247 = arith.divf %245, %246 : vector<8x64xf32>
    %248 = vector.extract_strided_slice %247 {offsets = [0, 0], sizes = [8, 32], strides = [1, 1]} : vector<8x64xf32> to vector<8x32xf32>
    %249 = vector.extract_strided_slice %247 {offsets = [0, 32], sizes = [8, 32], strides = [1, 1]} : vector<8x64xf32> to vector<8x32xf32>
    %250 = vector.extract_strided_slice %241 {offsets = [0, 64], sizes = [8, 32], strides = [1, 1]} : vector<8x128xf32> to vector<8x32xf32>
    %251 = vector.extract_strided_slice %241 {offsets = [0, 96], sizes = [8, 32], strides = [1, 1]} : vector<8x128xf32> to vector<8x32xf32>
    %252 = arith.mulf %248, %251 : vector<8x32xf32>
    %253 = arith.addf %250, %252 : vector<8x32xf32>
    %254 = math.tanh %253 : vector<8x32xf32>
    %cst_55 = arith.constant 1.000000e+00 : f32
    %255 = vector.broadcast %cst_55 : f32 to vector<8x32xf32>
    %256 = arith.subf %255, %249 : vector<8x32xf32>
    %257 = arith.mulf %256, %254 : vector<8x32xf32>
    %258 = arith.mulf %249, %214 : vector<8x32xf32>
    %259 = arith.addf %257, %258 : vector<8x32xf32>
    %cst_56 = arith.constant dense<0.000000e+00> : vector<8x32xf32>
    %260 = tpu.matmul %259, %1, %cst_56 {dimension_numbers = #tpu.dot_dimension_numbers<[1], [0], [0], [1], [0, 0, 1, 1], [], []>} : vector<8x32xf32>, vector<32x32xf32>, vector<8x32xf32> -> vector<8x32xf32>
    %261 = arith.addf %260, %7 : vector<8x32xf32>
    %cst_57 = arith.constant dense<0xFF800000> : vector<8xf32>
    %262 = vector.multi_reduction <maximumf>, %261, %cst_57 [1] : vector<8x32xf32> to vector<8xf32>
    %263 = vector.shape_cast %262 : vector<8xf32> to vector<8x1xf32>
    %264 = vector.broadcast %263 : vector<8x1xf32> to vector<8x32xf32>
    %265 = arith.subf %261, %264 : vector<8x32xf32>
    %266 = math.exp %265 : vector<8x32xf32>
    %cst_58 = arith.constant dense<0.000000e+00> : vector<8xf32>
    %267 = vector.multi_reduction <add>, %266, %cst_58 [1] : vector<8x32xf32> to vector<8xf32>
    %268 = vector.shape_cast %267 : vector<8xf32> to vector<8x1xf32>
    %269 = math.log %268 : vector<8x1xf32>
    %270 = arith.addf %269, %263 : vector<8x1xf32>
    %271 = vector.broadcast %270 : vector<8x1xf32> to vector<8x32xf32>
    %272 = arith.subf %261, %271 : vector<8x32xf32>
    %c0_59 = arith.constant 0 : index
    %c160 = arith.constant 160 : index
    %273 = vector.load %arg3[%c0_59, %c160] : memref<8x256xf32, #tpu.memory_space<vmem>>, vector<8x32xf32>
    tpu.vector_store %arg3[%c0_59, %c160], %272 {strides = array<i32>} : memref<8x256xf32, #tpu.memory_space<vmem>>, vector<8x32xf32>,
    %274 = vector.broadcast %263 : vector<8x1xf32> to vector<8x32xf32>
    %275 = arith.cmpf oeq, %261, %274 : vector<8x32xf32>
    %c32_i32_60 = arith.constant 32 : i32
    %276 = vector.broadcast %c32_i32_60 : i32 to vector<8x32xi32>
    %277 = arith.select %275, %8, %276 : vector<8x32xi1>, vector<8x32xi32>
    %cst_61 = arith.constant dense<2147483647> : vector<8xi32>
    %278 = vector.multi_reduction <minsi>, %277, %cst_61 [1] : vector<8x32xi32> to vector<8xi32>
    %279 = vector.shape_cast %278 : vector<8xi32> to vector<8x1xi32>
    %280 = vector.broadcast %279 : vector<8x1xi32> to vector<8x32xi32>
    %281 = arith.cmpi eq, %8, %280 : vector<8x32xi32>
    %282 = arith.extui %281 : vector<8x32xi1> to vector<8x32xi32>
    %283 = arith.sitofp %282 : vector<8x32xi32> to vector<8x32xf32>
    %284 = tpu.concatenate %283, %259 in 1 : vector<8x32xf32>, vector<8x32xf32> -> vector<8x64xf32>
    %cst_62 = arith.constant dense<0.000000e+00> : vector<8x128xf32>
    %285 = tpu.matmul %284, %0, %cst_62 {dimension_numbers = #tpu.dot_dimension_numbers<[1], [0], [0], [1], [0, 0, 1, 1], [], []>} : vector<8x64xf32>, vector<64x128xf32>, vector<8x128xf32> -> vector<8x128xf32>
    %286 = arith.addf %285, %4 : vector<8x128xf32>
    %287 = vector.extract_strided_slice %286 {offsets = [0, 0], sizes = [8, 64], strides = [1, 1]} : vector<8x128xf32> to vector<8x64xf32>
    %288 = arith.negf %287 : vector<8x64xf32>
    %289 = math.exp %288 : vector<8x64xf32>
    %cst_63 = arith.constant 1.000000e+00 : f32
    %290 = vector.broadcast %cst_63 : f32 to vector<8x64xf32>
    %291 = arith.addf %290, %289 : vector<8x64xf32>
    %292 = arith.divf %290, %291 : vector<8x64xf32>
    %293 = vector.extract_strided_slice %292 {offsets = [0, 0], sizes = [8, 32], strides = [1, 1]} : vector<8x64xf32> to vector<8x32xf32>
    %294 = vector.extract_strided_slice %292 {offsets = [0, 32], sizes = [8, 32], strides = [1, 1]} : vector<8x64xf32> to vector<8x32xf32>
    %295 = vector.extract_strided_slice %286 {offsets = [0, 64], sizes = [8, 32], strides = [1, 1]} : vector<8x128xf32> to vector<8x32xf32>
    %296 = vector.extract_strided_slice %286 {offsets = [0, 96], sizes = [8, 32], strides = [1, 1]} : vector<8x128xf32> to vector<8x32xf32>
    %297 = arith.mulf %293, %296 : vector<8x32xf32>
    %298 = arith.addf %295, %297 : vector<8x32xf32>
    %299 = math.tanh %298 : vector<8x32xf32>
    %cst_64 = arith.constant 1.000000e+00 : f32
    %300 = vector.broadcast %cst_64 : f32 to vector<8x32xf32>
    %301 = arith.subf %300, %294 : vector<8x32xf32>
    %302 = arith.mulf %301, %299 : vector<8x32xf32>
    %303 = arith.mulf %294, %259 : vector<8x32xf32>
    %304 = arith.addf %302, %303 : vector<8x32xf32>
    %cst_65 = arith.constant dense<0.000000e+00> : vector<8x32xf32>
    %305 = tpu.matmul %304, %1, %cst_65 {dimension_numbers = #tpu.dot_dimension_numbers<[1], [0], [0], [1], [0, 0, 1, 1], [], []>} : vector<8x32xf32>, vector<32x32xf32>, vector<8x32xf32> -> vector<8x32xf32>
    %306 = arith.addf %305, %7 : vector<8x32xf32>
    %cst_66 = arith.constant dense<0xFF800000> : vector<8xf32>
    %307 = vector.multi_reduction <maximumf>, %306, %cst_66 [1] : vector<8x32xf32> to vector<8xf32>
    %308 = vector.shape_cast %307 : vector<8xf32> to vector<8x1xf32>
    %309 = vector.broadcast %308 : vector<8x1xf32> to vector<8x32xf32>
    %310 = arith.subf %306, %309 : vector<8x32xf32>
    %311 = math.exp %310 : vector<8x32xf32>
    %cst_67 = arith.constant dense<0.000000e+00> : vector<8xf32>
    %312 = vector.multi_reduction <add>, %311, %cst_67 [1] : vector<8x32xf32> to vector<8xf32>
    %313 = vector.shape_cast %312 : vector<8xf32> to vector<8x1xf32>
    %314 = math.log %313 : vector<8x1xf32>
    %315 = arith.addf %314, %308 : vector<8x1xf32>
    %316 = vector.broadcast %315 : vector<8x1xf32> to vector<8x32xf32>
    %317 = arith.subf %306, %316 : vector<8x32xf32>
    %c0_68 = arith.constant 0 : index
    %c192 = arith.constant 192 : index
    %318 = vector.load %arg3[%c0_68, %c192] : memref<8x256xf32, #tpu.memory_space<vmem>>, vector<8x32xf32>
    tpu.vector_store %arg3[%c0_68, %c192], %317 {strides = array<i32>} : memref<8x256xf32, #tpu.memory_space<vmem>>, vector<8x32xf32>,
    %319 = vector.broadcast %308 : vector<8x1xf32> to vector<8x32xf32>
    %320 = arith.cmpf oeq, %306, %319 : vector<8x32xf32>
    %c32_i32_69 = arith.constant 32 : i32
    %321 = vector.broadcast %c32_i32_69 : i32 to vector<8x32xi32>
    %322 = arith.select %320, %8, %321 : vector<8x32xi1>, vector<8x32xi32>
    %cst_70 = arith.constant dense<2147483647> : vector<8xi32>
    %323 = vector.multi_reduction <minsi>, %322, %cst_70 [1] : vector<8x32xi32> to vector<8xi32>
    %324 = vector.shape_cast %323 : vector<8xi32> to vector<8x1xi32>
    %325 = vector.broadcast %324 : vector<8x1xi32> to vector<8x32xi32>
    %326 = arith.cmpi eq, %8, %325 : vector<8x32xi32>
    %327 = arith.extui %326 : vector<8x32xi1> to vector<8x32xi32>
    %328 = arith.sitofp %327 : vector<8x32xi32> to vector<8x32xf32>
    %329 = tpu.concatenate %328, %304 in 1 : vector<8x32xf32>, vector<8x32xf32> -> vector<8x64xf32>
    %cst_71 = arith.constant dense<0.000000e+00> : vector<8x128xf32>
    %330 = tpu.matmul %329, %0, %cst_71 {dimension_numbers = #tpu.dot_dimension_numbers<[1], [0], [0], [1], [0, 0, 1, 1], [], []>} : vector<8x64xf32>, vector<64x128xf32>, vector<8x128xf32> -> vector<8x128xf32>
    %331 = arith.addf %330, %4 : vector<8x128xf32>
    %332 = vector.extract_strided_slice %331 {offsets = [0, 0], sizes = [8, 64], strides = [1, 1]} : vector<8x128xf32> to vector<8x64xf32>
    %333 = arith.negf %332 : vector<8x64xf32>
    %334 = math.exp %333 : vector<8x64xf32>
    %cst_72 = arith.constant 1.000000e+00 : f32
    %335 = vector.broadcast %cst_72 : f32 to vector<8x64xf32>
    %336 = arith.addf %335, %334 : vector<8x64xf32>
    %337 = arith.divf %335, %336 : vector<8x64xf32>
    %338 = vector.extract_strided_slice %337 {offsets = [0, 0], sizes = [8, 32], strides = [1, 1]} : vector<8x64xf32> to vector<8x32xf32>
    %339 = vector.extract_strided_slice %337 {offsets = [0, 32], sizes = [8, 32], strides = [1, 1]} : vector<8x64xf32> to vector<8x32xf32>
    %340 = vector.extract_strided_slice %331 {offsets = [0, 64], sizes = [8, 32], strides = [1, 1]} : vector<8x128xf32> to vector<8x32xf32>
    %341 = vector.extract_strided_slice %331 {offsets = [0, 96], sizes = [8, 32], strides = [1, 1]} : vector<8x128xf32> to vector<8x32xf32>
    %342 = arith.mulf %338, %341 : vector<8x32xf32>
    %343 = arith.addf %340, %342 : vector<8x32xf32>
    %344 = math.tanh %343 : vector<8x32xf32>
    %cst_73 = arith.constant 1.000000e+00 : f32
    %345 = vector.broadcast %cst_73 : f32 to vector<8x32xf32>
    %346 = arith.subf %345, %339 : vector<8x32xf32>
    %347 = arith.mulf %346, %344 : vector<8x32xf32>
    %348 = arith.mulf %339, %304 : vector<8x32xf32>
    %349 = arith.addf %347, %348 : vector<8x32xf32>
    %cst_74 = arith.constant dense<0.000000e+00> : vector<8x32xf32>
    %350 = tpu.matmul %349, %1, %cst_74 {dimension_numbers = #tpu.dot_dimension_numbers<[1], [0], [0], [1], [0, 0, 1, 1], [], []>} : vector<8x32xf32>, vector<32x32xf32>, vector<8x32xf32> -> vector<8x32xf32>
    %351 = arith.addf %350, %7 : vector<8x32xf32>
    %cst_75 = arith.constant dense<0xFF800000> : vector<8xf32>
    %352 = vector.multi_reduction <maximumf>, %351, %cst_75 [1] : vector<8x32xf32> to vector<8xf32>
    %353 = vector.shape_cast %352 : vector<8xf32> to vector<8x1xf32>
    %354 = vector.broadcast %353 : vector<8x1xf32> to vector<8x32xf32>
    %355 = arith.subf %351, %354 : vector<8x32xf32>
    %356 = math.exp %355 : vector<8x32xf32>
    %cst_76 = arith.constant dense<0.000000e+00> : vector<8xf32>
    %357 = vector.multi_reduction <add>, %356, %cst_76 [1] : vector<8x32xf32> to vector<8xf32>
    %358 = vector.shape_cast %357 : vector<8xf32> to vector<8x1xf32>
    %359 = math.log %358 : vector<8x1xf32>
    %360 = arith.addf %359, %353 : vector<8x1xf32>
    %361 = vector.broadcast %360 : vector<8x1xf32> to vector<8x32xf32>
    %362 = arith.subf %351, %361 : vector<8x32xf32>
    %c0_77 = arith.constant 0 : index
    %c224 = arith.constant 224 : index
    %363 = vector.load %arg3[%c0_77, %c224] : memref<8x256xf32, #tpu.memory_space<vmem>>, vector<8x32xf32>
    tpu.vector_store %arg3[%c0_77, %c224], %362 {strides = array<i32>} : memref<8x256xf32, #tpu.memory_space<vmem>>, vector<8x32xf32>,
    %c0_78 = arith.constant 0 : index
    %c0_79 = arith.constant 0 : index
    %364 = vector.load %arg4[%c0_78, %c0_79] : memref<8x32xf32, #tpu.memory_space<vmem>>, vector<8x32xf32>
    tpu.vector_store %arg4[%c0_78, %c0_79], %349 {strides = array<i32>} : memref<8x32xf32, #tpu.memory_space<vmem>>, vector<8x32xf32>,
    return
  }
}

</mosaic_0001>

<llo_original>
// kernel: tpu_custom_call.1
$region0: #{tpu_custom_call.1}
  #allocation0 [shape = 'u32[]', space=smem, size = 0x4, offset = 0x4, fixed_abs, tag = 'smem constant byte address 0x4 - core index']
  #allocation1 [shape = 'u32[72,128]{1,0:T(1,128)}', space=vmem, size = 0x9000, scoped, tag = 'internal scratch']
  %s0 = inlined_call_operand.hbm [shape: f32[64,160], index: 0, kind: input, shape index: {}]
  %s1 = inlined_call_operand.hbm [shape: f32[1,160], index: 1, kind: input, shape index: {}]
  %s2 = inlined_call_operand.hbm [shape: f32[8,32], index: 2, kind: input, shape index: {}]
  %s3 = inlined_call_operand.hbm [shape: f32[8,256], index: 3, kind: output, shape index: {0}]
  %s4 = inlined_call_operand.hbm [shape: f32[8,32], index: 4, kind: output, shape index: {1}]
  %5 = xla_tuple %s3, %s4
  %s6 = sld [smem:[#allocation0]]
  $region42: #{tpu_custom_call.1} parent=0
    _
  %s8 = ssub.s32 1, %s6
  %s9 = scalar_select 0, %s8, %s6
  $region1: #{tpu_custom_call.1} parent=0
    #allocation2 [shape = 'u8[65536]{0}', space=vmem, size = 0x10000, scoped, tag = 'input window, operand 0, single buffered']
    #allocation3 [shape = 's32[1]{0}', space=sflag, size = 0x4, scoped, tag = 'scoped memory for tpu_custom_call.1']
    #allocation4 [shape = 's32[1]{0}', space=sflag, size = 0x4, scoped, tag = 'scoped memory for tpu_custom_call.1']
    #allocation5 [shape = 'u8[1024]{0}', space=vmem, size = 0x400, scoped, tag = 'input window, operand 1, single buffered']
    #allocation6 [shape = 's32[1]{0}', space=sflag, size = 0x4, scoped, tag = 'scoped memory for tpu_custom_call.1']
    #allocation7 [shape = 'u8[4096]{0}', space=vmem, size = 0x1000, scoped, tag = 'input window, operand 2, single buffered']
    #allocation8 [shape = 'u8[8192]{0}', space=vmem, size = 0x2000, scoped, tag = 'output window, operand 0, single buffered']
    #allocation9 [shape = 'u8[4096]{0}', space=vmem, size = 0x1000, scoped, tag = 'output window, operand 1, single buffered']
    #allocation10 [shape = 's32[1]{0}', space=sflag, size = 0x4, scoped, tag = 'scoped memory for tpu_custom_call.1']
    %10 = vsyncpa [#allocation3], 0
    %11 = vsyncpa [#allocation6], 0
    %12 = vsyncpa [#allocation4], 0
    %13 = vsyncpa [#allocation10], 0
    // Predicated region
    $region2: #{tpu_custom_call.1} parent=1 // pred_check
      _
    $region3: #{tpu_custom_call.1} parent=1 // pred_check_branch
      %15 = sbr.rel (0) target = $region5
    $region4: #{tpu_custom_call.1} parent=1 // pred_region
      %17 = vsyncadd [#allocation3], 0
      %s18 = sshll.u32 %s0, 4
      %s19 = int_to_ptr.hbm [resolvable:$true] %s18
      %s20 = sshll.u32 [#allocation2], 4
      %s21 = int_to_ptr.vmem [resolvable:$true] %s20
      %26 = dma.hbm_to_vmem [thread:$0]  %s19, 2048, %s21, [#allocation3], 256, 256, 16
    $region5: #{tpu_custom_call.1} parent=1 // pred_fallthru
      _
    // Predicated region
    $region6: #{tpu_custom_call.1} parent=1 // pred_check
      _
    $region7: #{tpu_custom_call.1} parent=1 // pred_check_branch
      %28 = sbr.rel (0) target = $region9
    $region8: #{tpu_custom_call.1} parent=1 // pred_region
      %30 = vsyncadd [#allocation6], 0
      %s32 = sshll.u32 %s1, 4
      %s33 = int_to_ptr.hbm [resolvable:$true] %s32
      %s34 = sshll.u32 [#allocation5], 4
      %s35 = int_to_ptr.vmem [resolvable:$true] %s34
      %37 = dma.hbm_to_vmem [thread:$0]  %s33, 32, %s35, [#allocation6]
    $region9: #{tpu_custom_call.1} parent=1 // pred_fallthru
      _
    // Predicated region
    $region10: #{tpu_custom_call.1} parent=1 // pred_check
      _
    $region11: #{tpu_custom_call.1} parent=1 // pred_check_branch
      %39 = sbr.rel (0) target = $region13
    $region12: #{tpu_custom_call.1} parent=1 // pred_region
      %41 = vsyncadd [#allocation6], 0
      %s43 = sshll.u32 %s2, 4
      %s44 = int_to_ptr.hbm [resolvable:$true] %s43
      %s45 = sshll.u32 [#allocation7], 4
      %s46 = int_to_ptr.vmem [resolvable:$true] %s45
      %48 = dma.hbm_to_vmem [thread:$0]  %s44, 128, %s46, [#allocation6]
    $region13: #{tpu_custom_call.1} parent=1 // pred_fallthru
      _
    // Predicated region
    $region14: #{tpu_custom_call.1} parent=1 // pred_check
      _
    $region15: #{tpu_custom_call.1} parent=1 // pred_check_branch
      %50 = sbr.rel (0) target = $region17
    $region16: #{tpu_custom_call.1} parent=1 // pred_region
      %52 = dma.done [#allocation3], 2048
    $region17: #{tpu_custom_call.1} parent=1 // pred_fallthru
      _
    // Predicated region
    $region18: #{tpu_custom_call.1} parent=1 // pred_check
      _
    $region19: #{tpu_custom_call.1} parent=1 // pred_check_branch
      %54 = sbr.rel (0) target = $region21
    $region20: #{tpu_custom_call.1} parent=1 // pred_region
      %56 = dma.done [#allocation6], 32
    $region21: #{tpu_custom_call.1} parent=1 // pred_fallthru
      _
    // Predicated region
    $region22: #{tpu_custom_call.1} parent=1 // pred_check
      _
    $region23: #{tpu_custom_call.1} parent=1 // pred_check_branch
      %58 = sbr.rel (0) target = $region25
    $region24: #{tpu_custom_call.1} parent=1 // pred_region
      %60 = dma.done [#allocation6], 128
    $region25: #{tpu_custom_call.1} parent=1 // pred_fallthru
      _
    %v61 = vld [vmem:[#allocation2] sm:$0xff]
    %v62 = vld [vmem:[#allocation2 + $0x10] sm:$0xff]
    %v63 = vld [vmem:[#allocation2 + $0x20] sm:$0xff]
    %v64 = vld [vmem:[#allocation2 + $0x30] sm:$0xff]
    %v65 = vld [vmem:[#allocation2 + $0x40] sm:$0xff]
    %v66 = vld [vmem:[#allocation2 + $0x50] sm:$0xff]
    %v67 = vld [vmem:[#allocation2 + $0x60] sm:$0xff]
    %v68 = vld [vmem:[#allocation2 + $0x70] sm:$0xff]
    %v69 = vld [vmem:[#allocation2 + $0x48] sm:$0xff]
    %v70 = vld [vmem:[#allocation2 + $0x58] sm:$0xff]
    %v71 = vld [vmem:[#allocation2 + $0x68] sm:$0xff]
    %v72 = vld [vmem:[#allocation2 + $0x78] sm:$0xff]
    %v73 = vld [vmem:[#allocation5] sm:$0x1]
    %v75 = vperm.slane %v73, 0
    %v77 = vld [vmem:[#allocation5 + $0x1] sm:$0x1]
    %v79 = vperm.slane %v77, 0
    %v81 = vlaneseq
    %v82 = vand.u32 %v81, 127
    %v83 = vld [vmem:[#allocation7] sm:$0xff]
    %vm84 = vcmp.eq.s32.totalorder %v82, 0
    %v85 = vsel %vm84, 1, 0
    %v86 = vcvt.s32.f32 %v85
    %88 = vrot.lane.b32.xlu0 %v83, 32
    %v89 = vpop.permute.xlu0 %88
    %vm91 = vcmask 261120
    %v92 = vsel %vm91, %v86, %v89
    %vm93 = vcmask 523264
    %v95 = vsel %vm93, %v92, 0
    %97 = vmatpush.msra.mxu0 0.0
    %98 = vmatpush.msra.mxu0 0.0
    %99 = vmatpush.msra.mxu0 0.0
    %100 = vmatpush.msra.mxu0 0.0
    %101 = vmatpush.msra.mxu0 0.0
    %102 = vmatpush.msra.mxu0 0.0
    %103 = vmatpush.msra.mxu0 0.0
    %104 = vmatpush.msra.mxu0 0.0
    %105 = vmatpush.msra.mxu0 %v68
    %106 = vmatpush.msra.mxu0 %v67
    %107 = vmatpush.msra.mxu0 %v66
    %108 = vmatpush.msra.mxu0 %v65
    %109 = vmatpush.msra.mxu0 %v64
    %110 = vmatpush.msra.mxu0 %v63
    %111 = vmatpush.msra.mxu0 %v62
    %112 = vmatpush.msra.mxu0 %v61
    %113 = vmatmul.f32.gmra.mxu0 %v95
    %v114 = vpop.f32.mrf.mxu0
    %v115 = vadd.f32 %v75, %v114
    %116 = vdwg.mxu0
    %v117 = vxor.u32 %v115, 2147483648
    %v118 = vmul.f32 %v117, 1.442695
    %v119 = vpow.pop %v118
    %v120 = vadd.f32 %v119, 1.0
    %v121 = vrcp.pop %v120
    %v122 = vmul.f32 %v120, %v121
    %v123 = vsub.f32 1.0, %v122
    %v124 = vmul.f32 %v121, %v123
    %v125 = vadd.f32 %v121, %v124
    %vm126 = vweird.f32 %v120
    %vm127 = vweird.f32 %v121
    %vm128 = vmor %vm126, %vm127
    %v129 = vsel %vm128, %v121, %v125
    %v130 = vand.u32 2147483647, %v120
    %vm131 = vcmp.eq.f32.partialorder %v130, 8.507059e+37
    %v132 = vand.u32 %v120, 2147483648
    %v133 = vor.u32 1.1754944e-38, %v132
    %v134 = vsel %vm131, %v133, %v129
    %v135 = vmul.f32 1.0, %v134
    %137 = vrot.lane.b32.xlu0 %v115, 32
    %v138 = vpop.permute.xlu0 %137
    %v140 = vmul.f32 %v135, %v138
    %142 = vrot.lane.b32.xlu0 %v140, 64
    %v143 = vpop.permute.xlu0 %142
    %v145 = vadd.f32 %v115, %v143
    %v146 = vtanh.pop %v145
    %v147 = vsub.f32 1.0, %v135
    %149 = vrot.lane.b32.xlu0 %v146, 96
    %v150 = vpop.permute.xlu0 %149
    %v152 = vmul.f32 %v147, %v150
    %v153 = vmul.f32 %v135, %v89
    %v154 = vadd.f32 %v152, %v153
    %156 = vrot.lane.b32.xlu0 %v154, 96
    %v157 = vpop.permute.xlu0 %156
    %v158 = vsel %vm91, %v157, 0
    %160 = vmatpush.msra.mxu0 0.0
    %161 = vmatpush.msra.mxu0 0.0
    %162 = vmatpush.msra.mxu0 0.0
    %163 = vmatpush.msra.mxu0 0.0
    %164 = vmatpush.msra.mxu0 0.0
    %165 = vmatpush.msra.mxu0 0.0
    %166 = vmatpush.msra.mxu0 0.0
    %167 = vmatpush.msra.mxu0 0.0
    %168 = vmatpush.msra.mxu0 0.0
    %169 = vmatpush.msra.mxu0 0.0
    %170 = vmatpush.msra.mxu0 0.0
    %171 = vmatpush.msra.mxu0 0.0
    %172 = vmatpush.msra.mxu0 %v72
    %173 = vmatpush.msra.mxu0 %v71
    %174 = vmatpush.msra.mxu0 %v70
    %175 = vmatpush.msra.mxu0 %v69
    %176 = vmatmul.f32.gmra.mxu0 %v158
    %v177 = vpop.f32.mrf.mxu0
    %v178 = vadd.f32 %v79, %v177
    %179 = vdwg.mxu0
    %v180 = vsel %vm91, %v178, -inf
    %181 = vmax.xlane.f32.xlu0 %v180
    %v182 = vpop.xlane.xlu0 %181
    %v183 = vsub.f32 %v178, %v182
    %v184 = vmul.f32 %v183, 1.442695
    %v185 = vpow.pop %v184
    %v186 = vsel %vm91, %v185, 0.0
    %187 = vadd.xlane.f32.xlu0 %v186
    %v188 = vpop.xlane.xlu0 %187
    %v189 = vlog2.pop %v188
    %v190 = vmul.f32 %v189, 0.6931472
    %v191 = vadd.f32 %v190, %v182
    %v192 = vsub.f32 %v178, %v191
    %193 = vst.msk [vmem:[#allocation8] sm:$0xff] %vm91, %v192
    %vm194 = vcmp.eq.f32.partialorder %v178, %v182
    %v195 = vsel %vm194, %v82, 32
    %v196 = vsel %vm91, %v195, 2147483647
    %v197 = vand.u32 %v196, 65535
    %v198 = vshra.s32 %v196, 16
    %v199 = vcvt.s32.f32 %v197
    %v200 = vcvt.s32.f32 %v198
    %201 = vmin.xlane.f32.xlu0 %v200
    %v202 = vpop.xlane.xlu0 %201
    %vm203 = vcmp.eq.f32.partialorder %v200, %v202
    %v204 = vsel %vm203, %v199, inf
    %205 = vmin.xlane.f32.xlu0 %v204
    %v206 = vpop.xlane.xlu0 %205
    %v207 = vcvt.f32.s32 %v206
    %v208 = vcvt.f32.s32 %v202
    %v209 = vshll.u32 %v208, 16
    %v210 = vadd.s32 %v209, %v207
    %vm211 = vcmp.eq.s32.totalorder %v82, %v210
    %v212 = vsel %vm211, 1, 0
    %v213 = vcvt.s32.f32 %v212
    %v214 = vsel %vm91, %v213, %v154
    %v216 = vsel %vm93, %v214, 0
    %218 = vmatpush.msra.mxu0 0.0
    %219 = vmatpush.msra.mxu0 0.0
    %220 = vmatpush.msra.mxu0 0.0
    %221 = vmatpush.msra.mxu0 0.0
    %222 = vmatpush.msra.mxu0 0.0
    %223 = vmatpush.msra.mxu0 0.0
    %224 = vmatpush.msra.mxu0 0.0
    %225 = vmatpush.msra.mxu0 0.0
    %226 = vmatpush.msra.mxu0 %v68
    %227 = vmatpush.msra.mxu0 %v67
    %228 = vmatpush.msra.mxu0 %v66
    %229 = vmatpush.msra.mxu0 %v65
    %230 = vmatpush.msra.mxu0 %v64
    %231 = vmatpush.msra.mxu0 %v63
    %232 = vmatpush.msra.mxu0 %v62
    %233 = vmatpush.msra.mxu0 %v61
    %234 = vmatmul.f32.gmra.mxu0 %v216
    %v235 = vpop.f32.mrf.mxu0
    %v236 = vadd.f32 %v75, %v235
    %237 = vdwg.mxu0
    %v238 = vxor.u32 %v236, 2147483648
    %v239 = vmul.f32 %v238, 1.442695
    %v240 = vpow.pop %v239
    %v241 = vadd.f32 %v240, 1.0
    %v242 = vrcp.pop %v241
    %v243 = vmul.f32 %v241, %v242
    %v244 = vsub.f32 1.0, %v243
    %v245 = vmul.f32 %v242, %v244
    %v246 = vadd.f32 %v242, %v245
    %vm247 = vweird.f32 %v241
    %vm248 = vweird.f32 %v242
    %vm249 = vmor %vm247, %vm248
    %v250 = vsel %vm249, %v242, %v246
    %v251 = vand.u32 2147483647, %v241
    %vm252 = vcmp.eq.f32.partialorder %v251, 8.507059e+37
    %v253 = vand.u32 %v241, 2147483648
    %v254 = vor.u32 1.1754944e-38, %v253
    %v255 = vsel %vm252, %v254, %v250
    %v256 = vmul.f32 1.0, %v255
    %258 = vrot.lane.b32.xlu0 %v236, 32
    %v259 = vpop.permute.xlu0 %258
    %v261 = vmul.f32 %v256, %v259
    %263 = vrot.lane.b32.xlu0 %v261, 64
    %v264 = vpop.permute.xlu0 %263
    %v266 = vadd.f32 %v236, %v264
    %v267 = vtanh.pop %v266
    %v268 = vsub.f32 1.0, %v256
    %270 = vrot.lane.b32.xlu0 %v267, 96
    %v271 = vpop.permute.xlu0 %270
    %v273 = vmul.f32 %v268, %v271
    %v274 = vmul.f32 %v256, %v154
    %v275 = vadd.f32 %v273, %v274
    %277 = vrot.lane.b32.xlu0 %v275, 96
    %v278 = vpop.permute.xlu0 %277
    %v279 = vsel %vm91, %v278, 0
    %281 = vmatpush.msra.mxu0 0.0
    %282 = vmatpush.msra.mxu0 0.0
    %283 = vmatpush.msra.mxu0 0.0
    %284 = vmatpush.msra.mxu0 0.0
    %285 = vmatpush.msra.mxu0 0.0
    %286 = vmatpush.msra.mxu0 0.0
    %287 = vmatpush.msra.mxu0 0.0
    %288 = vmatpush.msra.mxu0 0.0
    %289 = vmatpush.msra.mxu0 0.0
    %290 = vmatpush.msra.mxu0 0.0
    %291 = vmatpush.msra.mxu0 0.0
    %292 = vmatpush.msra.mxu0 0.0
    %293 = vmatpush.msra.mxu0 %v72
    %294 = vmatpush.msra.mxu0 %v71
    %295 = vmatpush.msra.mxu0 %v70
    %296 = vmatpush.msra.mxu0 %v69
    %297 = vmatmul.f32.gmra.mxu0 %v279
    %v298 = vpop.f32.mrf.mxu0
    %v299 = vadd.f32 %v79, %v298
    %300 = vdwg.mxu0
    %v301 = vsel %vm91, %v299, -inf
    %302 = vmax.xlane.f32.xlu0 %v301
    %v303 = vpop.xlane.xlu0 %302
    %v304 = vsub.f32 %v299, %v303
    %v305 = vmul.f32 %v304, 1.442695
    %v306 = vpow.pop %v305
    %v307 = vsel %vm91, %v306, 0.0
    %308 = vadd.xlane.f32.xlu0 %v307
    %v309 = vpop.xlane.xlu0 %308
    %v310 = vlog2.pop %v309
    %v311 = vmul.f32 %v310, 0.6931472
    %v312 = vadd.f32 %v311, %v303
    %v313 = vsub.f32 %v299, %v312
    %315 = vrot.lane.b32.xlu0 %v313, 32
    %v316 = vpop.permute.xlu0 %315
    %vm318 = vcmask 523520
    %319 = vst.msk [vmem:[#allocation8] sm:$0xff] %vm318, %v316
    %vm320 = vcmp.eq.f32.partialorder %v299, %v303
    %v321 = vsel %vm320, %v82, 32
    %v322 = vsel %vm91, %v321, 2147483647
    %v323 = vand.u32 %v322, 65535
    %v324 = vshra.s32 %v322, 16
    %v325 = vcvt.s32.f32 %v323
    %v326 = vcvt.s32.f32 %v324
    %327 = vmin.xlane.f32.xlu0 %v326
    %v328 = vpop.xlane.xlu0 %327
    %vm329 = vcmp.eq.f32.partialorder %v326, %v328
    %v330 = vsel %vm329, %v325, inf
    %331 = vmin.xlane.f32.xlu0 %v330
    %v332 = vpop.xlane.xlu0 %331
    %v333 = vcvt.f32.s32 %v332
    %v334 = vcvt.f32.s32 %v328
    %v335 = vshll.u32 %v334, 16
    %v336 = vadd.s32 %v335, %v333
    %vm337 = vcmp.eq.s32.totalorder %v82, %v336
    %v338 = vsel %vm337, 1, 0
    %v339 = vcvt.s32.f32 %v338
    %v340 = vsel %vm91, %v339, %v275
    %v342 = vsel %vm93, %v340, 0
    %344 = vmatpush.msra.mxu0 0.0
    %345 = vmatpush.msra.mxu0 0.0
    %346 = vmatpush.msra.mxu0 0.0
    %347 = vmatpush.msra.mxu0 0.0
    %348 = vmatpush.msra.mxu0 0.0
    %349 = vmatpush.msra.mxu0 0.0
    %350 = vmatpush.msra.mxu0 0.0
    %351 = vmatpush.msra.mxu0 0.0
    %352 = vmatpush.msra.mxu0 %v68
    %353 = vmatpush.msra.mxu0 %v67
    %354 = vmatpush.msra.mxu0 %v66
    %355 = vmatpush.msra.mxu0 %v65
    %356 = vmatpush.msra.mxu0 %v64
    %357 = vmatpush.msra.mxu0 %v63
    %358 = vmatpush.msra.mxu0 %v62
    %359 = vmatpush.msra.mxu0 %v61
    %360 = vmatmul.f32.gmra.mxu0 %v342
    %v361 = vpop.f32.mrf.mxu0
    %v362 = vadd.f32 %v75, %v361
    %363 = vdwg.mxu0
    %v364 = vxor.u32 %v362, 2147483648
    %v365 = vmul.f32 %v364, 1.442695
    %v366 = vpow.pop %v365
    %v367 = vadd.f32 %v366, 1.0
    %v368 = vrcp.pop %v367
    %v369 = vmul.f32 %v367, %v368
    %v370 = vsub.f32 1.0, %v369
    %v371 = vmul.f32 %v368, %v370
    %v372 = vadd.f32 %v368, %v371
    %vm373 = vweird.f32 %v367
    %vm374 = vweird.f32 %v368
    %vm375 = vmor %vm373, %vm374
    %v376 = vsel %vm375, %v368, %v372
    %v377 = vand.u32 2147483647, %v367
    %vm378 = vcmp.eq.f32.partialorder %v377, 8.507059e+37
    %v379 = vand.u32 %v367, 2147483648
    %v380 = vor.u32 1.1754944e-38, %v379
    %v381 = vsel %vm378, %v380, %v376
    %v382 = vmul.f32 1.0, %v381
    %384 = vrot.lane.b32.xlu0 %v362, 32
    %v385 = vpop.permute.xlu0 %384
    %v387 = vmul.f32 %v382, %v385
    %389 = vrot.lane.b32.xlu0 %v387, 64
    %v390 = vpop.permute.xlu0 %389
    %v392 = vadd.f32 %v362, %v390
    %v393 = vtanh.pop %v392
    %v394 = vsub.f32 1.0, %v382
    %396 = vrot.lane.b32.xlu0 %v393, 96
    %v397 = vpop.permute.xlu0 %396
    %v399 = vmul.f32 %v394, %v397
    %v400 = vmul.f32 %v382, %v275
    %v401 = vadd.f32 %v399, %v400
    %403 = vrot.lane.b32.xlu0 %v401, 96
    %v404 = vpop.permute.xlu0 %403
    %v405 = vsel %vm91, %v404, 0
    %407 = vmatpush.msra.mxu0 0.0
    %408 = vmatpush.msra.mxu0 0.0
    %409 = vmatpush.msra.mxu0 0.0
    %410 = vmatpush.msra.mxu0 0.0
    %411 = vmatpush.msra.mxu0 0.0
    %412 = vmatpush.msra.mxu0 0.0
    %413 = vmatpush.msra.mxu0 0.0
    %414 = vmatpush.msra.mxu0 0.0
    %415 = vmatpush.msra.mxu0 0.0
    %416 = vmatpush.msra.mxu0 0.0
    %417 = vmatpush.msra.mxu0 0.0
    %418 = vmatpush.msra.mxu0 0.0
    %419 = vmatpush.msra.mxu0 %v72
    %420 = vmatpush.msra.mxu0 %v71
    %421 = vmatpush.msra.mxu0 %v70
    %422 = vmatpush.msra.mxu0 %v69
    %423 = vmatmul.f32.gmra.mxu0 %v405
    %v424 = vpop.f32.mrf.mxu0
    %v425 = vadd.f32 %v79, %v424
    %426 = vdwg.mxu0
    %v427 = vsel %vm91, %v425, -inf
    %428 = vmax.xlane.f32.xlu0 %v427
    %v429 = vpop.xlane.xlu0 %428
    %v430 = vsub.f32 %v425, %v429
    %v431 = vmul.f32 %v430, 1.442695
    %v432 = vpow.pop %v431
    %v433 = vsel %vm91, %v432, 0.0
    %434 = vadd.xlane.f32.xlu0 %v433
    %v435 = vpop.xlane.xlu0 %434
    %v436 = vlog2.pop %v435
    %v437 = vmul.f32 %v436, 0.6931472
    %v438 = vadd.f32 %v437, %v429
    %v439 = vsub.f32 %v425, %v438
    %441 = vrot.lane.b32.xlu0 %v439, 64
    %v442 = vpop.permute.xlu0 %441
    %vm444 = vcmask 785920
    %445 = vst.msk [vmem:[#allocation8] sm:$0xff] %vm444, %v442
    %vm446 = vcmp.eq.f32.partialorder %v425, %v429
    %v447 = vsel %vm446, %v82, 32
    %v448 = vsel %vm91, %v447, 2147483647
    %v449 = vand.u32 %v448, 65535
    %v450 = vshra.s32 %v448, 16
    %v451 = vcvt.s32.f32 %v449
    %v452 = vcvt.s32.f32 %v450
    %453 = vmin.xlane.f32.xlu0 %v452
    %v454 = vpop.xlane.xlu0 %453
    %vm455 = vcmp.eq.f32.partialorder %v452, %v454
    %v456 = vsel %vm455, %v451, inf
    %457 = vmin.xlane.f32.xlu0 %v456
    %v458 = vpop.xlane.xlu0 %457
    %v459 = vcvt.f32.s32 %v458
    %v460 = vcvt.f32.s32 %v454
    %v461 = vshll.u32 %v460, 16
    %v462 = vadd.s32 %v461, %v459
    %vm463 = vcmp.eq.s32.totalorder %v82, %v462
    %v464 = vsel %vm463, 1, 0
    %v465 = vcvt.s32.f32 %v464
    %v466 = vsel %vm91, %v465, %v401
    %v468 = vsel %vm93, %v466, 0
    %470 = vmatpush.msra.mxu0 0.0
    %471 = vmatpush.msra.mxu0 0.0
    %472 = vmatpush.msra.mxu0 0.0
    %473 = vmatpush.msra.mxu0 0.0
    %474 = vmatpush.msra.mxu0 0.0
    %475 = vmatpush.msra.mxu0 0.0
    %476 = vmatpush.msra.mxu0 0.0
    %477 = vmatpush.msra.mxu0 0.0
    %478 = vmatpush.msra.mxu0 %v68
    %479 = vmatpush.msra.mxu0 %v67
    %480 = vmatpush.msra.mxu0 %v66
    %481 = vmatpush.msra.mxu0 %v65
    %482 = vmatpush.msra.mxu0 %v64
    %483 = vmatpush.msra.mxu0 %v63
    %484 = vmatpush.msra.mxu0 %v62
    %485 = vmatpush.msra.mxu0 %v61
    %486 = vmatmul.f32.gmra.mxu0 %v468
    %v487 = vpop.f32.mrf.mxu0
    %v488 = vadd.f32 %v75, %v487
    %489 = vdwg.mxu0
    %v490 = vxor.u32 %v488, 2147483648
    %v491 = vmul.f32 %v490, 1.442695
    %v492 = vpow.pop %v491
    %v493 = vadd.f32 %v492, 1.0
    %v494 = vrcp.pop %v493
    %v495 = vmul.f32 %v493, %v494
    %v496 = vsub.f32 1.0, %v495
    %v497 = vmul.f32 %v494, %v496
    %v498 = vadd.f32 %v494, %v497
    %vm499 = vweird.f32 %v493
    %vm500 = vweird.f32 %v494
    %vm501 = vmor %vm499, %vm500
    %v502 = vsel %vm501, %v494, %v498
    %v503 = vand.u32 2147483647, %v493
    %vm504 = vcmp.eq.f32.partialorder %v503, 8.507059e+37
    %v505 = vand.u32 %v493, 2147483648
    %v506 = vor.u32 1.1754944e-38, %v505
    %v507 = vsel %vm504, %v506, %v502
    %v508 = vmul.f32 1.0, %v507
    %510 = vrot.lane.b32.xlu0 %v488, 32
    %v511 = vpop.permute.xlu0 %510
    %v513 = vmul.f32 %v508, %v511
    %515 = vrot.lane.b32.xlu0 %v513, 64
    %v516 = vpop.permute.xlu0 %515
    %v518 = vadd.f32 %v488, %v516
    %v519 = vtanh.pop %v518
    %v520 = vsub.f32 1.0, %v508
    %522 = vrot.lane.b32.xlu0 %v519, 96
    %v523 = vpop.permute.xlu0 %522
    %v525 = vmul.f32 %v520, %v523
    %v526 = vmul.f32 %v508, %v401
    %v527 = vadd.f32 %v525, %v526
    %529 = vrot.lane.b32.xlu0 %v527, 96
    %v530 = vpop.permute.xlu0 %529
    %v531 = vsel %vm91, %v530, 0
    %533 = vmatpush.msra.mxu0 0.0
    %534 = vmatpush.msra.mxu0 0.0
    %535 = vmatpush.msra.mxu0 0.0
    %536 = vmatpush.msra.mxu0 0.0
    %537 = vmatpush.msra.mxu0 0.0
    %538 = vmatpush.msra.mxu0 0.0
    %539 = vmatpush.msra.mxu0 0.0
    %540 = vmatpush.msra.mxu0 0.0
    %541 = vmatpush.msra.mxu0 0.0
    %542 = vmatpush.msra.mxu0 0.0
    %543 = vmatpush.msra.mxu0 0.0
    %544 = vmatpush.msra.mxu0 0.0
    %545 = vmatpush.msra.mxu0 %v72
    %546 = vmatpush.msra.mxu0 %v71
    %547 = vmatpush.msra.mxu0 %v70
    %548 = vmatpush.msra.mxu0 %v69
    %549 = vmatmul.f32.gmra.mxu0 %v531
    %v550 = vpop.f32.mrf.mxu0
    %v551 = vadd.f32 %v79, %v550
    %552 = vdwg.mxu0
    %v553 = vsel %vm91, %v551, -inf
    %554 = vmax.xlane.f32.xlu0 %v553
    %v555 = vpop.xlane.xlu0 %554
    %v556 = vsub.f32 %v551, %v555
    %v557 = vmul.f32 %v556, 1.442695
    %v558 = vpow.pop %v557
    %v559 = vsel %vm91, %v558, 0.0
    %560 = vadd.xlane.f32.xlu0 %v559
    %v561 = vpop.xlane.xlu0 %560
    %v562 = vlog2.pop %v561
    %v563 = vmul.f32 %v562, 0.6931472
    %v564 = vadd.f32 %v563, %v555
    %v565 = vsub.f32 %v551, %v564
    %567 = vrot.lane.b32.xlu0 %v565, 96
    %v568 = vpop.permute.xlu0 %567
    %vm570 = vcmask 1048320
    %571 = vst.msk [vmem:[#allocation8] sm:$0xff] %vm570, %v568
    %vm572 = vcmp.eq.f32.partialorder %v551, %v555
    %v573 = vsel %vm572, %v82, 32
    %v574 = vsel %vm91, %v573, 2147483647
    %v575 = vand.u32 %v574, 65535
    %v576 = vshra.s32 %v574, 16
    %v577 = vcvt.s32.f32 %v575
    %v578 = vcvt.s32.f32 %v576
    %579 = vmin.xlane.f32.xlu0 %v578
    %v580 = vpop.xlane.xlu0 %579
    %vm581 = vcmp.eq.f32.partialorder %v578, %v580
    %v582 = vsel %vm581, %v577, inf
    %583 = vmin.xlane.f32.xlu0 %v582
    %v584 = vpop.xlane.xlu0 %583
    %v585 = vcvt.f32.s32 %v584
    %v586 = vcvt.f32.s32 %v580
    %v587 = vshll.u32 %v586, 16
    %v588 = vadd.s32 %v587, %v585
    %vm589 = vcmp.eq.s32.totalorder %v82, %v588
    %v590 = vsel %vm589, 1, 0
    %v591 = vcvt.s32.f32 %v590
    %v592 = vsel %vm91, %v591, %v527
    %v594 = vsel %vm93, %v592, 0
    %596 = vmatpush.msra.mxu0 0.0
    %597 = vmatpush.msra.mxu0 0.0
    %598 = vmatpush.msra.mxu0 0.0
    %599 = vmatpush.msra.mxu0 0.0
    %600 = vmatpush.msra.mxu0 0.0
    %601 = vmatpush.msra.mxu0 0.0
    %602 = vmatpush.msra.mxu0 0.0
    %603 = vmatpush.msra.mxu0 0.0
    %604 = vmatpush.msra.mxu0 %v68
    %605 = vmatpush.msra.mxu0 %v67
    %606 = vmatpush.msra.mxu0 %v66
    %607 = vmatpush.msra.mxu0 %v65
    %608 = vmatpush.msra.mxu0 %v64
    %609 = vmatpush.msra.mxu0 %v63
    %610 = vmatpush.msra.mxu0 %v62
    %611 = vmatpush.msra.mxu0 %v61
    %612 = vmatmul.f32.gmra.mxu0 %v594
    %v613 = vpop.f32.mrf.mxu0
    %v614 = vadd.f32 %v75, %v613
    %615 = vdwg.mxu0
    %v616 = vxor.u32 %v614, 2147483648
    %v617 = vmul.f32 %v616, 1.442695
    %v618 = vpow.pop %v617
    %v619 = vadd.f32 %v618, 1.0
    %v620 = vrcp.pop %v619
    %v621 = vmul.f32 %v619, %v620
    %v622 = vsub.f32 1.0, %v621
    %v623 = vmul.f32 %v620, %v622
    %v624 = vadd.f32 %v620, %v623
    %vm625 = vweird.f32 %v619
    %vm626 = vweird.f32 %v620
    %vm627 = vmor %vm625, %vm626
    %v628 = vsel %vm627, %v620, %v624
    %v629 = vand.u32 2147483647, %v619
    %vm630 = vcmp.eq.f32.partialorder %v629, 8.507059e+37
    %v631 = vand.u32 %v619, 2147483648
    %v632 = vor.u32 1.1754944e-38, %v631
    %v633 = vsel %vm630, %v632, %v628
    %v634 = vmul.f32 1.0, %v633
    %636 = vrot.lane.b32.xlu0 %v614, 32
    %v637 = vpop.permute.xlu0 %636
    %v639 = vmul.f32 %v634, %v637
    %641 = vrot.lane.b32.xlu0 %v639, 64
    %v642 = vpop.permute.xlu0 %641
    %v644 = vadd.f32 %v614, %v642
    %v645 = vtanh.pop %v644
    %v646 = vsub.f32 1.0, %v634
    %648 = vrot.lane.b32.xlu0 %v645, 96
    %v649 = vpop.permute.xlu0 %648
    %v651 = vmul.f32 %v646, %v649
    %v652 = vmul.f32 %v634, %v527
    %v653 = vadd.f32 %v651, %v652
    %655 = vrot.lane.b32.xlu0 %v653, 96
    %v656 = vpop.permute.xlu0 %655
    %v657 = vsel %vm91, %v656, 0
    %659 = vmatpush.msra.mxu0 0.0
    %660 = vmatpush.msra.mxu0 0.0
    %661 = vmatpush.msra.mxu0 0.0
    %662 = vmatpush.msra.mxu0 0.0
    %663 = vmatpush.msra.mxu0 0.0
    %664 = vmatpush.msra.mxu0 0.0
    %665 = vmatpush.msra.mxu0 0.0
    %666 = vmatpush.msra.mxu0 0.0
    %667 = vmatpush.msra.mxu0 0.0
    %668 = vmatpush.msra.mxu0 0.0
    %669 = vmatpush.msra.mxu0 0.0
    %670 = vmatpush.msra.mxu0 0.0
    %671 = vmatpush.msra.mxu0 %v72
    %672 = vmatpush.msra.mxu0 %v71
    %673 = vmatpush.msra.mxu0 %v70
    %674 = vmatpush.msra.mxu0 %v69
    %675 = vmatmul.f32.gmra.mxu0 %v657
    %v676 = vpop.f32.mrf.mxu0
    %v677 = vadd.f32 %v79, %v676
    %678 = vdwg.mxu0
    %v679 = vsel %vm91, %v677, -inf
    %680 = vmax.xlane.f32.xlu0 %v679
    %v681 = vpop.xlane.xlu0 %680
    %v682 = vsub.f32 %v677, %v681
    %v683 = vmul.f32 %v682, 1.442695
    %v684 = vpow.pop %v683
    %v685 = vsel %vm91, %v684, 0.0
    %686 = vadd.xlane.f32.xlu0 %v685
    %v687 = vpop.xlane.xlu0 %686
    %v688 = vlog2.pop %v687
    %v689 = vmul.f32 %v688, 0.6931472
    %v690 = vadd.f32 %v689, %v681
    %v691 = vsub.f32 %v677, %v690
    %692 = vst.msk [vmem:[#allocation8 + $0x8] sm:$0xff] %vm91, %v691
    %vm693 = vcmp.eq.f32.partialorder %v677, %v681
    %v694 = vsel %vm693, %v82, 32
    %v695 = vsel %vm91, %v694, 2147483647
    %v696 = vand.u32 %v695, 65535
    %v697 = vshra.s32 %v695, 16
    %v698 = vcvt.s32.f32 %v696
    %v699 = vcvt.s32.f32 %v697
    %700 = vmin.xlane.f32.xlu0 %v699
    %v701 = vpop.xlane.xlu0 %700
    %vm702 = vcmp.eq.f32.partialorder %v699, %v701
    %v703 = vsel %vm702, %v698, inf
    %704 = vmin.xlane.f32.xlu0 %v703
    %v705 = vpop.xlane.xlu0 %704
    %v706 = vcvt.f32.s32 %v705
    %v707 = vcvt.f32.s32 %v701
    %v708 = vshll.u32 %v707, 16
    %v709 = vadd.s32 %v708, %v706
    %vm710 = vcmp.eq.s32.totalorder %v82, %v709
    %v711 = vsel %vm710, 1, 0
    %v712 = vcvt.s32.f32 %v711
    %v713 = vsel %vm91, %v712, %v653
    %v715 = vsel %vm93, %v713, 0
    %717 = vmatpush.msra.mxu0 0.0
    %718 = vmatpush.msra.mxu0 0.0
    %719 = vmatpush.msra.mxu0 0.0
    %720 = vmatpush.msra.mxu0 0.0
    %721 = vmatpush.msra.mxu0 0.0
    %722 = vmatpush.msra.mxu0 0.0
    %723 = vmatpush.msra.mxu0 0.0
    %724 = vmatpush.msra.mxu0 0.0
    %725 = vmatpush.msra.mxu0 %v68
    %726 = vmatpush.msra.mxu0 %v67
    %727 = vmatpush.msra.mxu0 %v66
    %728 = vmatpush.msra.mxu0 %v65
    %729 = vmatpush.msra.mxu0 %v64
    %730 = vmatpush.msra.mxu0 %v63
    %731 = vmatpush.msra.mxu0 %v62
    %732 = vmatpush.msra.mxu0 %v61
    %733 = vmatmul.f32.gmra.mxu0 %v715
    %v734 = vpop.f32.mrf.mxu0
    %v735 = vadd.f32 %v75, %v734
    %736 = vdwg.mxu0
    %v737 = vxor.u32 %v735, 2147483648
    %v738 = vmul.f32 %v737, 1.442695
    %v739 = vpow.pop %v738
    %v740 = vadd.f32 %v739, 1.0
    %v741 = vrcp.pop %v740
    %v742 = vmul.f32 %v740, %v741
    %v743 = vsub.f32 1.0, %v742
    %v744 = vmul.f32 %v741, %v743
    %v745 = vadd.f32 %v741, %v744
    %vm746 = vweird.f32 %v740
    %vm747 = vweird.f32 %v741
    %vm748 = vmor %vm746, %vm747
    %v749 = vsel %vm748, %v741, %v745
    %v750 = vand.u32 2147483647, %v740
    %vm751 = vcmp.eq.f32.partialorder %v750, 8.507059e+37
    %v752 = vand.u32 %v740, 2147483648
    %v753 = vor.u32 1.1754944e-38, %v752
    %v754 = vsel %vm751, %v753, %v749
    %v755 = vmul.f32 1.0, %v754
    %757 = vrot.lane.b32.xlu0 %v735, 32
    %v758 = vpop.permute.xlu0 %757
    %v760 = vmul.f32 %v755, %v758
    %762 = vrot.lane.b32.xlu0 %v760, 64
    %v763 = vpop.permute.xlu0 %762
    %v765 = vadd.f32 %v735, %v763
    %v766 = vtanh.pop %v765
    %v767 = vsub.f32 1.0, %v755
    %769 = vrot.lane.b32.xlu0 %v766, 96
    %v770 = vpop.permute.xlu0 %769
    %v772 = vmul.f32 %v767, %v770
    %v773 = vmul.f32 %v755, %v653
    %v774 = vadd.f32 %v772, %v773
    %776 = vrot.lane.b32.xlu0 %v774, 96
    %v777 = vpop.permute.xlu0 %776
    %v778 = vsel %vm91, %v777, 0
    %780 = vmatpush.msra.mxu0 0.0
    %781 = vmatpush.msra.mxu0 0.0
    %782 = vmatpush.msra.mxu0 0.0
    %783 = vmatpush.msra.mxu0 0.0
    %784 = vmatpush.msra.mxu0 0.0
    %785 = vmatpush.msra.mxu0 0.0
    %786 = vmatpush.msra.mxu0 0.0
    %787 = vmatpush.msra.mxu0 0.0
    %788 = vmatpush.msra.mxu0 0.0
    %789 = vmatpush.msra.mxu0 0.0
    %790 = vmatpush.msra.mxu0 0.0
    %791 = vmatpush.msra.mxu0 0.0
    %792 = vmatpush.msra.mxu0 %v72
    %793 = vmatpush.msra.mxu0 %v71
    %794 = vmatpush.msra.mxu0 %v70
    %795 = vmatpush.msra.mxu0 %v69
    %796 = vmatmul.f32.gmra.mxu0 %v778
    %v797 = vpop.f32.mrf.mxu0
    %v798 = vadd.f32 %v79, %v797
    %799 = vdwg.mxu0
    %v800 = vsel %vm91, %v798, -inf
    %801 = vmax.xlane.f32.xlu0 %v800
    %v802 = vpop.xlane.xlu0 %801
    %v803 = vsub.f32 %v798, %v802
    %v804 = vmul.f32 %v803, 1.442695
    %v805 = vpow.pop %v804
    %v806 = vsel %vm91, %v805, 0.0
    %807 = vadd.xlane.f32.xlu0 %v806
    %v808 = vpop.xlane.xlu0 %807
    %v809 = vlog2.pop %v808
    %v810 = vmul.f32 %v809, 0.6931472
    %v811 = vadd.f32 %v810, %v802
    %v812 = vsub.f32 %v798, %v811
    %814 = vrot.lane.b32.xlu0 %v812, 32
    %v815 = vpop.permute.xlu0 %814
    %817 = vst.msk [vmem:[#allocation8 + $0x8] sm:$0xff] %vm318, %v815
    %vm818 = vcmp.eq.f32.partialorder %v798, %v802
    %v819 = vsel %vm818, %v82, 32
    %v820 = vsel %vm91, %v819, 2147483647
    %v821 = vand.u32 %v820, 65535
    %v822 = vshra.s32 %v820, 16
    %v823 = vcvt.s32.f32 %v821
    %v824 = vcvt.s32.f32 %v822
    %825 = vmin.xlane.f32.xlu0 %v824
    %v826 = vpop.xlane.xlu0 %825
    %vm827 = vcmp.eq.f32.partialorder %v824, %v826
    %v828 = vsel %vm827, %v823, inf
    %829 = vmin.xlane.f32.xlu0 %v828
    %v830 = vpop.xlane.xlu0 %829
    %v831 = vcvt.f32.s32 %v830
    %v832 = vcvt.f32.s32 %v826
    %v833 = vshll.u32 %v832, 16
    %v834 = vadd.s32 %v833, %v831
    %vm835 = vcmp.eq.s32.totalorder %v82, %v834
    %v836 = vsel %vm835, 1, 0
    %v837 = vcvt.s32.f32 %v836
    %v838 = vsel %vm91, %v837, %v774
    %v840 = vsel %vm93, %v838, 0
    %842 = vmatpush.msra.mxu0 0.0
    %843 = vmatpush.msra.mxu0 0.0
    %844 = vmatpush.msra.mxu0 0.0
    %845 = vmatpush.msra.mxu0 0.0
    %846 = vmatpush.msra.mxu0 0.0
    %847 = vmatpush.msra.mxu0 0.0
    %848 = vmatpush.msra.mxu0 0.0
    %849 = vmatpush.msra.mxu0 0.0
    %850 = vmatpush.msra.mxu0 %v68
    %851 = vmatpush.msra.mxu0 %v67
    %852 = vmatpush.msra.mxu0 %v66
    %853 = vmatpush.msra.mxu0 %v65
    %854 = vmatpush.msra.mxu0 %v64
    %855 = vmatpush.msra.mxu0 %v63
    %856 = vmatpush.msra.mxu0 %v62
    %857 = vmatpush.msra.mxu0 %v61
    %858 = vmatmul.f32.gmra.mxu0 %v840
    %v859 = vpop.f32.mrf.mxu0
    %v860 = vadd.f32 %v75, %v859
    %861 = vdwg.mxu0
    %v862 = vxor.u32 %v860, 2147483648
    %v863 = vmul.f32 %v862, 1.442695
    %v864 = vpow.pop %v863
    %v865 = vadd.f32 %v864, 1.0
    %v866 = vrcp.pop %v865
    %v867 = vmul.f32 %v865, %v866
    %v868 = vsub.f32 1.0, %v867
    %v869 = vmul.f32 %v866, %v868
    %v870 = vadd.f32 %v866, %v869
    %vm871 = vweird.f32 %v865
    %vm872 = vweird.f32 %v866
    %vm873 = vmor %vm871, %vm872
    %v874 = vsel %vm873, %v866, %v870
    %v875 = vand.u32 2147483647, %v865
    %vm876 = vcmp.eq.f32.partialorder %v875, 8.507059e+37
    %v877 = vand.u32 %v865, 2147483648
    %v878 = vor.u32 1.1754944e-38, %v877
    %v879 = vsel %vm876, %v878, %v874
    %v880 = vmul.f32 1.0, %v879
    %882 = vrot.lane.b32.xlu0 %v860, 32
    %v883 = vpop.permute.xlu0 %882
    %v885 = vmul.f32 %v880, %v883
    %887 = vrot.lane.b32.xlu0 %v885, 64
    %v888 = vpop.permute.xlu0 %887
    %v890 = vadd.f32 %v860, %v888
    %v891 = vtanh.pop %v890
    %v892 = vsub.f32 1.0, %v880
    %894 = vrot.lane.b32.xlu0 %v891, 96
    %v895 = vpop.permute.xlu0 %894
    %v897 = vmul.f32 %v892, %v895
    %v898 = vmul.f32 %v880, %v774
    %v899 = vadd.f32 %v897, %v898
    %901 = vrot.lane.b32.xlu0 %v899, 96
    %v902 = vpop.permute.xlu0 %901
    %v903 = vsel %vm91, %v902, 0
    %905 = vmatpush.msra.mxu0 0.0
    %906 = vmatpush.msra.mxu0 0.0
    %907 = vmatpush.msra.mxu0 0.0
    %908 = vmatpush.msra.mxu0 0.0
    %909 = vmatpush.msra.mxu0 0.0
    %910 = vmatpush.msra.mxu0 0.0
    %911 = vmatpush.msra.mxu0 0.0
    %912 = vmatpush.msra.mxu0 0.0
    %913 = vmatpush.msra.mxu0 0.0
    %914 = vmatpush.msra.mxu0 0.0
    %915 = vmatpush.msra.mxu0 0.0
    %916 = vmatpush.msra.mxu0 0.0
    %917 = vmatpush.msra.mxu0 %v72
    %918 = vmatpush.msra.mxu0 %v71
    %919 = vmatpush.msra.mxu0 %v70
    %920 = vmatpush.msra.mxu0 %v69
    %921 = vmatmul.f32.gmra.mxu0 %v903
    %v922 = vpop.f32.mrf.mxu0
    %v923 = vadd.f32 %v79, %v922
    %924 = vdwg.mxu0
    %v925 = vsel %vm91, %v923, -inf
    %926 = vmax.xlane.f32.xlu0 %v925
    %v927 = vpop.xlane.xlu0 %926
    %v928 = vsub.f32 %v923, %v927
    %v929 = vmul.f32 %v928, 1.442695
    %v930 = vpow.pop %v929
    %v931 = vsel %vm91, %v930, 0.0
    %932 = vadd.xlane.f32.xlu0 %v931
    %v933 = vpop.xlane.xlu0 %932
    %v934 = vlog2.pop %v933
    %v935 = vmul.f32 %v934, 0.6931472
    %v936 = vadd.f32 %v935, %v927
    %v937 = vsub.f32 %v923, %v936
    %939 = vrot.lane.b32.xlu0 %v937, 64
    %v940 = vpop.permute.xlu0 %939
    %942 = vst.msk [vmem:[#allocation8 + $0x8] sm:$0xff] %vm444, %v940
    %vm943 = vcmp.eq.f32.partialorder %v923, %v927
    %v944 = vsel %vm943, %v82, 32
    %v945 = vsel %vm91, %v944, 2147483647
    %v946 = vand.u32 %v945, 65535
    %v947 = vshra.s32 %v945, 16
    %v948 = vcvt.s32.f32 %v946
    %v949 = vcvt.s32.f32 %v947
    %950 = vmin.xlane.f32.xlu0 %v949
    %v951 = vpop.xlane.xlu0 %950
    %vm952 = vcmp.eq.f32.partialorder %v949, %v951
    %v953 = vsel %vm952, %v948, inf
    %954 = vmin.xlane.f32.xlu0 %v953
    %v955 = vpop.xlane.xlu0 %954
    %v956 = vcvt.f32.s32 %v955
    %v957 = vcvt.f32.s32 %v951
    %v958 = vshll.u32 %v957, 16
    %v959 = vadd.s32 %v958, %v956
    %vm960 = vcmp.eq.s32.totalorder %v82, %v959
    %v961 = vsel %vm960, 1, 0
    %v962 = vcvt.s32.f32 %v961
    %v963 = vsel %vm91, %v962, %v899
    %v965 = vsel %vm93, %v963, 0
    %967 = vmatpush.msra.mxu0 0.0
    %968 = vmatpush.msra.mxu0 0.0
    %969 = vmatpush.msra.mxu0 0.0
    %970 = vmatpush.msra.mxu0 0.0
    %971 = vmatpush.msra.mxu0 0.0
    %972 = vmatpush.msra.mxu0 0.0
    %973 = vmatpush.msra.mxu0 0.0
    %974 = vmatpush.msra.mxu0 0.0
    %975 = vmatpush.msra.mxu0 %v68
    %976 = vmatpush.msra.mxu0 %v67
    %977 = vmatpush.msra.mxu0 %v66
    %978 = vmatpush.msra.mxu0 %v65
    %979 = vmatpush.msra.mxu0 %v64
    %980 = vmatpush.msra.mxu0 %v63
    %981 = vmatpush.msra.mxu0 %v62
    %982 = vmatpush.msra.mxu0 %v61
    %983 = vmatmul.f32.gmra.mxu0 %v965
    %v984 = vpop.f32.mrf.mxu0
    %v985 = vadd.f32 %v75, %v984
    %986 = vdwg.mxu0
    %v987 = vxor.u32 %v985, 2147483648
    %v988 = vmul.f32 %v987, 1.442695
    %v989 = vpow.pop %v988
    %v990 = vadd.f32 %v989, 1.0
    %v991 = vrcp.pop %v990
    %v992 = vmul.f32 %v990, %v991
    %v993 = vsub.f32 1.0, %v992
    %v994 = vmul.f32 %v991, %v993
    %v995 = vadd.f32 %v991, %v994
    %vm996 = vweird.f32 %v990
    %vm997 = vweird.f32 %v991
    %vm998 = vmor %vm996, %vm997
    %v999 = vsel %vm998, %v991, %v995
    %v1000 = vand.u32 2147483647, %v990
    %vm1001 = vcmp.eq.f32.partialorder %v1000, 8.507059e+37
    %v1002 = vand.u32 %v990, 2147483648
    %v1003 = vor.u32 1.1754944e-38, %v1002
    %v1004 = vsel %vm1001, %v1003, %v999
    %v1005 = vmul.f32 1.0, %v1004
    %1007 = vrot.lane.b32.xlu0 %v985, 32
    %v1008 = vpop.permute.xlu0 %1007
    %v1010 = vmul.f32 %v1005, %v1008
    %1012 = vrot.lane.b32.xlu0 %v1010, 64
    %v1013 = vpop.permute.xlu0 %1012
    %v1015 = vadd.f32 %v985, %v1013
    %v1016 = vtanh.pop %v1015
    %v1017 = vsub.f32 1.0, %v1005
    %1019 = vrot.lane.b32.xlu0 %v1016, 96
    %v1020 = vpop.permute.xlu0 %1019
    %v1022 = vmul.f32 %v1017, %v1020
    %v1023 = vmul.f32 %v1005, %v899
    %v1024 = vadd.f32 %v1022, %v1023
    %1026 = vrot.lane.b32.xlu0 %v1024, 96
    %v1027 = vpop.permute.xlu0 %1026
    %v1028 = vsel %vm91, %v1027, 0
    %1030 = vmatpush.msra.mxu0 0.0
    %1031 = vmatpush.msra.mxu0 0.0
    %1032 = vmatpush.msra.mxu0 0.0
    %1033 = vmatpush.msra.mxu0 0.0
    %1034 = vmatpush.msra.mxu0 0.0
    %1035 = vmatpush.msra.mxu0 0.0
    %1036 = vmatpush.msra.mxu0 0.0
    %1037 = vmatpush.msra.mxu0 0.0
    %1038 = vmatpush.msra.mxu0 0.0
    %1039 = vmatpush.msra.mxu0 0.0
    %1040 = vmatpush.msra.mxu0 0.0
    %1041 = vmatpush.msra.mxu0 0.0
    %1042 = vmatpush.msra.mxu0 %v72
    %1043 = vmatpush.msra.mxu0 %v71
    %1044 = vmatpush.msra.mxu0 %v70
    %1045 = vmatpush.msra.mxu0 %v69
    %1046 = vmatmul.f32.gmra.mxu0 %v1028
    %v1047 = vpop.f32.mrf.mxu0
    %v1048 = vadd.f32 %v79, %v1047
    %1049 = vdwg.mxu0
    %v1050 = vsel %vm91, %v1048, -inf
    %1051 = vmax.xlane.f32.xlu0 %v1050
    %v1052 = vpop.xlane.xlu0 %1051
    %v1053 = vsub.f32 %v1048, %v1052
    %v1054 = vmul.f32 %v1053, 1.442695
    %v1055 = vpow.pop %v1054
    %v1056 = vsel %vm91, %v1055, 0.0
    %1057 = vadd.xlane.f32.xlu0 %v1056
    %v1058 = vpop.xlane.xlu0 %1057
    %v1059 = vlog2.pop %v1058
    %v1060 = vmul.f32 %v1059, 0.6931472
    %v1061 = vadd.f32 %v1060, %v1052
    %v1062 = vsub.f32 %v1048, %v1061
    %1064 = vrot.lane.b32.xlu0 %v1062, 96
    %v1065 = vpop.permute.xlu0 %1064
    %1067 = vst.msk [vmem:[#allocation8 + $0x8] sm:$0xff] %vm570, %v1065
    %1069 = vst.msk [vmem:[#allocation9] sm:$0xff] %vm91, %v1027
    // Predicated region
    $region26: #{tpu_custom_call.1} parent=1 // pred_check
      _
    $region27: #{tpu_custom_call.1} parent=1 // pred_check_branch
      %1071 = sbr.rel (0) target = $region29
    $region28: #{tpu_custom_call.1} parent=1 // pred_region
      %1073 = vsyncadd [#allocation4], 0
      %s1075 = sshll.u32 [#allocation8], 4
      %s1076 = int_to_ptr.vmem [resolvable:$true] %s1075
      %s1077 = sshll.u32 %s3, 4
      %s1078 = int_to_ptr.hbm [resolvable:$true] %s1077
      %1080 = dma.vmem_to_hbm [thread:$0]  %s1076, 256, %s1078, [#allocation4]
    $region29: #{tpu_custom_call.1} parent=1 // pred_fallthru
      _
    // Predicated region
    $region30: #{tpu_custom_call.1} parent=1 // pred_check
      _
    $region31: #{tpu_custom_call.1} parent=1 // pred_check_branch
      %1082 = sbr.rel (0) target = $region33
    $region32: #{tpu_custom_call.1} parent=1 // pred_region
      %1084 = vsyncadd [#allocation10], 0
      %s1086 = sshll.u32 [#allocation9], 4
      %s1087 = int_to_ptr.vmem [resolvable:$true] %s1086
      %s1088 = sshll.u32 %s4, 4
      %s1089 = int_to_ptr.hbm [resolvable:$true] %s1088
      %1091 = dma.vmem_to_hbm [thread:$0]  %s1087, 128, %s1089, [#allocation10]
    $region33: #{tpu_custom_call.1} parent=1 // pred_fallthru
      _
    // Predicated region
    $region34: #{tpu_custom_call.1} parent=1 // pred_check
      _
    $region35: #{tpu_custom_call.1} parent=1 // pred_check_branch
      %1093 = sbr.rel (0) target = $region37
    $region36: #{tpu_custom_call.1} parent=1 // pred_region
      %1095 = dma.done [#allocation4], 256
    $region37: #{tpu_custom_call.1} parent=1 // pred_fallthru
      _
    // Predicated region
    $region38: #{tpu_custom_call.1} parent=1 // pred_check
      _
    $region39: #{tpu_custom_call.1} parent=1 // pred_check_branch
      %1097 = sbr.rel (0) target = $region41
    $region40: #{tpu_custom_call.1} parent=1 // pred_region
      %1099 = dma.done [#allocation10], 128
    $region41: #{tpu_custom_call.1} parent=1 // pred_fallthru
      _
    %1100 = vsyncpa [#allocation3], 1
    %1101 = vsyncpa [#allocation6], 1
    %1102 = vsyncpa [#allocation4], 1
    %1103 = vsyncpa [#allocation10], 1

</llo_original>
